<compile_context>
chip_gen: v6e
topology: v6e:2x2x1
jax: 0.10.0
libtpu: 0.0.40
codegen_flags: <defaults>
</compile_context>

<pallas_src>
import jax
import jax.numpy as jnp
from jax.experimental import pallas as pl
from jax.experimental.pallas import tpu as pltpu

# ---- Hyperparameters (mirror Palette_Basis_Net.__init__) ---------------------
POS_ENCODE_DIM = 2                                            # freqs = 2 (hard-wired in kernel)
INPUT_DATA_DIM = 3
OUT_COLOR_DIM = 3
HIDDEN_DIM = 64
FEA_CHANNEL = INPUT_DATA_DIM * (2 * POS_ENCODE_DIM + 1) + 1   # 16
OUT_CHANNEL = 2 * OUT_COLOR_DIM * POS_ENCODE_DIM + 1          # 13
IN_DIM0 = FEA_CHANNEL + 3                                     # 19 (times + coords + PE + diff_colors)
PACK_DIM = 8                                                  # packed raw rows: [t, x, y, z, dr, dg, db, 0]


def _round_up(x, m):
    return (x + m - 1) // m * m


# ---- Reference positional encoding (NeRF / TensoRF convention) ---------------
def positional_encoding(positions, freqs):
    freq_bands = 2.0 ** jnp.arange(freqs, dtype=positions.dtype)          # [freqs]
    pts = positions[..., None] * freq_bands                               # [..., 3, freqs]
    pts = pts.reshape(positions.shape[:-1] + (positions.shape[-1] * freqs,))
    return jnp.concatenate([jnp.sin(pts), jnp.cos(pts)], axis=-1)         # [..., 3*2*freqs]


# ---- Pallas kernel (feature-major / rows-in-lanes layout) ---------------------
def _palette_kernel(x_ref, wa_ref, ws1_ref, ws2_ref, wc1_ref, wc2_ref,
                    wor_ref, bor_ref, wom_ref, offs_ref, omega_ref):
    f32 = jnp.float32
    x = x_ref[...]                                        # [8, tm]: rows [t,x,y,z,dr,dg,db,0]
    x2 = 2.0 * x

    # basis_net[0] (no bias) as 5 accumulating matmuls; unused rows hit zero weight
    # columns so no slicing / concat of narrow tiles is ever needed.
    h = jnp.dot(wa_ref[...], x, preferred_element_type=f32)               # linear + diff_colors
    h = h + jnp.dot(ws1_ref[...], jnp.sin(x), preferred_element_type=f32)   # sin(x,y,z)
    h = h + jnp.dot(ws2_ref[...], jnp.sin(x2), preferred_element_type=f32)  # sin(2x,2y,2z)
    h = h + jnp.dot(wc1_ref[...], jnp.cos(x), preferred_element_type=f32)   # cos(x,y,z)
    h = h + jnp.dot(wc2_ref[...], jnp.cos(x2), preferred_element_type=f32)  # cos(2x,2y,2z)

    # ELU(alpha=1); exp(min(h,0)) keeps the discarded branch from overflowing.
    h = jnp.where(h > 0, h, jnp.exp(jnp.minimum(h, 0.0)) - 1.0)           # [64, tm]

    # basis_net[1] folded into both heads (done in the wrapper); two small matmuls.
    offs = jnp.dot(wor_ref[...], h, preferred_element_type=f32) + bor_ref[...]   # [nb3p1, tm]
    om = jnp.dot(wom_ref[...], h, preferred_element_type=f32)                    # [nb, tm]

    # Softplus (numerically stable) + 0.05, normalize over the basis (sublane) axis.
    om = jnp.maximum(om, 0.0) + jnp.log1p(jnp.exp(-jnp.abs(om))) + 0.05
    om = om * pl.reciprocal(jnp.sum(om, axis=0, keepdims=True), approx=True)

    offs_ref[...] = offs.astype(offs_ref.dtype)
    omega_ref[...] = om.astype(omega_ref.dtype)


# ---- Wrapper -----------------------------------------------------------------
def palette_basis_net(coords, times, diff_colors, params, *, num_basis, tm=8192):
    """coords [B,N,3], times [B,N,1], diff_colors [B,N,3] -> (offsets_radiance, omega)."""
    B, N, _ = coords.shape
    M = B * N
    nb3p1 = num_basis * 3 + 1

    w0, w1, wor, bor, wom = params
    w0 = w0.astype(jnp.float32)
    z1 = jnp.zeros((1, HIDDEN_DIM), jnp.float32)
    z4 = jnp.zeros((4, HIDDEN_DIM), jnp.float32)

    # Weights for the 5 in-kernel accumulating matmuls; each is [64, 8] with columns
    # aligned to the packed rows [t, x, y, z, dr, dg, db, 0].  W0 row layout matches
    # torch: [t, x, y, z, sin x, sin 2x, sin y, sin 2y, sin z, sin 2z,
    #         cos x, cos 2x, cos y, cos 2y, cos z, cos 2z, dr, dg, db].
    wa = jnp.concatenate([w0[0:4], w0[16:19], z1], axis=0).T                    # [64, 8]
    ws1 = jnp.concatenate([z1, w0[4:5], w0[6:7], w0[8:9], z4], axis=0).T        # sin(coords)
    ws2 = jnp.concatenate([z1, w0[5:6], w0[7:8], w0[9:10], z4], axis=0).T       # sin(2*coords)
    wc1 = jnp.concatenate([z1, w0[10:11], w0[12:13], w0[14:15], z4], axis=0).T  # cos(coords)
    wc2 = jnp.concatenate([z1, w0[11:12], w0[13:14], w0[15:16], z4], axis=0).T  # cos(2*coords)

    # Fold basis_net[1] into each head (f32, highest precision).
    hp = jax.lax.Precision.HIGHEST
    worf = jnp.dot(w1, wor, precision=hp).T.astype(jnp.float32)   # [nb3p1, 64]
    womf = jnp.dot(w1, wom, precision=hp).T.astype(jnp.float32)   # [num_basis, 64]
    borT = bor.astype(jnp.float32).reshape(nb3p1, 1)              # [nb3p1, 1]

    # Feature-major packed input: [8, M] with rows [t, x, y, z, dr, dg, db, 0].
    t = times.astype(jnp.float32).reshape(M, 1)
    c = coords.astype(jnp.float32).reshape(M, 3)
    d = diff_colors.astype(jnp.float32).reshape(M, 3)
    packed = jnp.concatenate([t, c, d, jnp.zeros((M, 1), jnp.float32)], axis=-1).T  # [8, M]

    # Tile selection: lane tiles are multiples of 128; cap so the grid has >=2 steps
    # whenever M allows (lets the 'parallel' axis shard across both TCs on v7x).
    tm = max(128, _round_up(int(tm), 128))
    half = _round_up(max(1, (M + 1) // 2), 128)
    tm_eff = min(tm, half)
    M_pad = _round_up(M, tm_eff)
    if M_pad != M:
        packed = jnp.pad(packed, ((0, 0), (0, M_pad - M)))   # zero columns are harmless

    offs_t, omega_t = pl.pallas_call(
        _palette_kernel,
        out_shape=(jax.ShapeDtypeStruct((nb3p1, M_pad), jnp.float32),
                   jax.ShapeDtypeStruct((num_basis, M_pad), jnp.float32)),
        grid_spec=pltpu.PrefetchScalarGridSpec(
            num_scalar_prefetch=0,
            grid=(M_pad // tm_eff,),
            in_specs=[
                pl.BlockSpec((PACK_DIM, tm_eff), lambda i: (0, i)),        # packed raw rows
                pl.BlockSpec((HIDDEN_DIM, PACK_DIM), lambda i: (0, 0)),    # W_a   (linear+diff)
                pl.BlockSpec((HIDDEN_DIM, PACK_DIM), lambda i: (0, 0)),    # W_sin1
                pl.BlockSpec((HIDDEN_DIM, PACK_DIM), lambda i: (0, 0)),    # W_sin2
                pl.BlockSpec((HIDDEN_DIM, PACK_DIM), lambda i: (0, 0)),    # W_cos1
                pl.BlockSpec((HIDDEN_DIM, PACK_DIM), lambda i: (0, 0)),    # W_cos2
                pl.BlockSpec((nb3p1, HIDDEN_DIM), lambda i: (0, 0)),       # folded offsets head
                pl.BlockSpec((nb3p1, 1), lambda i: (0, 0)),                # offsets bias
                pl.BlockSpec((num_basis, HIDDEN_DIM), lambda i: (0, 0)),   # folded omega head
            ],
            out_specs=(pl.BlockSpec((nb3p1, tm_eff), lambda i: (0, i)),
                       pl.BlockSpec((num_basis, tm_eff), lambda i: (0, i))),
        ),
        compiler_params=pltpu.CompilerParams(
            dimension_semantics=("parallel",),
            vmem_limit_bytes=32 * 1024 * 1024),
    )(packed, wa, ws1, ws2, wc1, wc2, worf, borT, womf)

    offs = offs_t[:, :M].T.reshape(B, N, nb3p1)
    omega = omega_t[:, :M].T.reshape(B, N, num_basis)
    return offs, omega


# ---- Deterministic parameter init (shapes from __init__; [in_dim, out_dim]) ---
def init_params(key, num_basis):
    nb3p1 = num_basis * 3 + 1
    ks = jax.random.split(key, 5)

    def lin(k, fan_in, fan_out):
        bound = 1.0 / jnp.sqrt(jnp.float32(fan_in))
        return jax.random.uniform(k, (fan_in, fan_out), jnp.float32, -bound, bound)

    w0 = lin(ks[0], IN_DIM0, HIDDEN_DIM)        # basis_net[0]: 19 -> 64, no bias
    w1 = lin(ks[1], HIDDEN_DIM, OUT_CHANNEL)    # basis_net[1]: 64 -> 13, no bias
    wor = lin(ks[2], OUT_CHANNEL, nb3p1)        # offsets_radiance_net weight
    bor = lin(ks[3], OUT_CHANNEL, nb3p1)[:1]    # offsets_radiance_net bias, [1, nb3p1]
    wom = lin(ks[4], OUT_CHANNEL, num_basis)    # omega_net Linear, no bias
    return (w0, w1, wor, bor, wom)


# ---- Pure-JAX reference (mirrors the PyTorch forward exactly) -----------------
def palette_basis_net_ref(coords, times, diff_colors, params, *, num_basis):
    w0, w1, wor, bor, wom = params
    feat = jnp.concatenate(
        [times, coords, positional_encoding(coords, POS_ENCODE_DIM), diff_colors], axis=-1)
    h = feat @ w0
    h = jnp.where(h > 0, h, jnp.exp(h) - 1.0)
    pg = h @ w1
    offs = pg @ wor + bor[0]
    om = jax.nn.softplus(pg @ wom) + 0.05
    om = om / jnp.sum(om, axis=-1, keepdims=True)
    return offs, om


def _check(B, N, num_basis, key):
    kc, kt, kd = jax.random.split(key, 3)
    params = init_params(jax.random.PRNGKey(0), num_basis)
    coords = jax.random.uniform(kc, (B, N, 3), jnp.float32, -1.0, 1.0)
    times = jax.random.uniform(kt, (B, N, 1), jnp.float32, 0.0, 1.0)
    diff_colors = jax.random.uniform(kd, (B, N, 3), jnp.float32, 0.0, 1.0)

    offs, omega = palette_basis_net(coords, times, diff_colors, params, num_basis=num_basis)
    jax.block_until_ready((offs, omega))

    offs_ref, omega_ref = palette_basis_net_ref(coords, times, diff_colors, params,
                                                num_basis=num_basis)
    assert offs.shape == (B, N, num_basis * 3 + 1)
    assert omega.shape == (B, N, num_basis)
    # Tolerances: w1-folding changes float association; omega uses approx reciprocal.
    assert jnp.allclose(offs, offs_ref, atol=1e-3, rtol=1e-3)
    assert jnp.allclose(omega, omega_ref, atol=2e-3, rtol=2e-3)


if __name__ == "__main__":
    num_basis = 4
    key = jax.random.PRNGKey(0)
    k1, k2 = jax.random.split(key)
    _check(B=4, N=64, num_basis=num_basis, key=k1)    # M=256 -> 2 grid steps (megacore path)
    _check(B=2, N=50, num_basis=num_basis, key=k2)    # exercises the padded-M path
    print("KERNEL_OK")
</pallas_src>

<mosaic_0001>
module attributes {stable_mosaic.version = 11 : i64} {
  func.func @_palette_kernel(%arg0: i32, %arg1: memref<8x128xf32, #tpu.memory_space<vmem>>, %arg2: memref<64x8xf32, #tpu.memory_space<vmem>>, %arg3: memref<64x8xf32, #tpu.memory_space<vmem>>, %arg4: memref<64x8xf32, #tpu.memory_space<vmem>>, %arg5: memref<64x8xf32, #tpu.memory_space<vmem>>, %arg6: memref<64x8xf32, #tpu.memory_space<vmem>>, %arg7: memref<13x64xf32, #tpu.memory_space<vmem>>, %arg8: memref<13x1xf32, #tpu.memory_space<vmem>>, %arg9: memref<4x64xf32, #tpu.memory_space<vmem>>, %arg10: memref<13x128xf32, #tpu.memory_space<vmem>>, %arg11: memref<4x128xf32, #tpu.memory_space<vmem>>) attributes {dimension_semantics = [#tpu.dimension_semantics<parallel>], iteration_bounds = array<i64: 2>, scalar_prefetch = 0 : i64, scratch_operands = 0 : i64, tpu.core_type = #tpu.core_type<tc>, window_params = [{transform_indices = @transform_0, window_bounds = array<i64: 8, 128>}, {pipeline_mode = #tpu.pipeline_mode<synchronous>, transform_indices = @transform_1, window_bounds = array<i64: 64, 8>}, {pipeline_mode = #tpu.pipeline_mode<synchronous>, transform_indices = @transform_2, window_bounds = array<i64: 64, 8>}, {pipeline_mode = #tpu.pipeline_mode<synchronous>, transform_indices = @transform_3, window_bounds = array<i64: 64, 8>}, {pipeline_mode = #tpu.pipeline_mode<synchronous>, transform_indices = @transform_4, window_bounds = array<i64: 64, 8>}, {pipeline_mode = #tpu.pipeline_mode<synchronous>, transform_indices = @transform_5, window_bounds = array<i64: 64, 8>}, {pipeline_mode = #tpu.pipeline_mode<synchronous>, transform_indices = @transform_6, window_bounds = array<i64: 13, 64>}, {pipeline_mode = #tpu.pipeline_mode<synchronous>, transform_indices = @transform_7, window_bounds = array<i64: 13, 1>}, {pipeline_mode = #tpu.pipeline_mode<synchronous>, transform_indices = @transform_8, window_bounds = array<i64: 4, 64>}, {transform_indices = @transform_9, window_bounds = array<i64: 13, 128>}, {transform_indices = @transform_10, window_bounds = array<i64: 4, 128>}]} {
    %c0 = arith.constant 0 : index
    %c0_0 = arith.constant 0 : index
    %0 = vector.load %arg1[%c0, %c0_0] : memref<8x128xf32, #tpu.memory_space<vmem>>, vector<8x128xf32>
    %cst = arith.constant 2.000000e+00 : f32
    %1 = vector.broadcast %cst : f32 to vector<8x128xf32>
    %2 = arith.mulf %1, %0 : vector<8x128xf32>
    %c0_1 = arith.constant 0 : index
    %c0_2 = arith.constant 0 : index
    %3 = vector.load %arg2[%c0_1, %c0_2] : memref<64x8xf32, #tpu.memory_space<vmem>>, vector<64x8xf32>
    %cst_3 = arith.constant dense<0.000000e+00> : vector<64x128xf32>
    %4 = tpu.matmul %3, %0, %cst_3 {dimension_numbers = #tpu.dot_dimension_numbers<[1], [0], [0], [1], [0, 0, 1, 1], [], []>} : vector<64x8xf32>, vector<8x128xf32>, vector<64x128xf32> -> vector<64x128xf32>
    %c0_4 = arith.constant 0 : index
    %c0_5 = arith.constant 0 : index
    %5 = vector.load %arg3[%c0_4, %c0_5] : memref<64x8xf32, #tpu.memory_space<vmem>>, vector<64x8xf32>
    %6 = math.sin %0 : vector<8x128xf32>
    %cst_6 = arith.constant dense<0.000000e+00> : vector<64x128xf32>
    %7 = tpu.matmul %5, %6, %cst_6 {dimension_numbers = #tpu.dot_dimension_numbers<[1], [0], [0], [1], [0, 0, 1, 1], [], []>} : vector<64x8xf32>, vector<8x128xf32>, vector<64x128xf32> -> vector<64x128xf32>
    %8 = arith.addf %4, %7 : vector<64x128xf32>
    %c0_7 = arith.constant 0 : index
    %c0_8 = arith.constant 0 : index
    %9 = vector.load %arg4[%c0_7, %c0_8] : memref<64x8xf32, #tpu.memory_space<vmem>>, vector<64x8xf32>
    %10 = math.sin %2 : vector<8x128xf32>
    %cst_9 = arith.constant dense<0.000000e+00> : vector<64x128xf32>
    %11 = tpu.matmul %9, %10, %cst_9 {dimension_numbers = #tpu.dot_dimension_numbers<[1], [0], [0], [1], [0, 0, 1, 1], [], []>} : vector<64x8xf32>, vector<8x128xf32>, vector<64x128xf32> -> vector<64x128xf32>
    %12 = arith.addf %8, %11 : vector<64x128xf32>
    %c0_10 = arith.constant 0 : index
    %c0_11 = arith.constant 0 : index
    %13 = vector.load %arg5[%c0_10, %c0_11] : memref<64x8xf32, #tpu.memory_space<vmem>>, vector<64x8xf32>
    %14 = math.cos %0 : vector<8x128xf32>
    %cst_12 = arith.constant dense<0.000000e+00> : vector<64x128xf32>
    %15 = tpu.matmul %13, %14, %cst_12 {dimension_numbers = #tpu.dot_dimension_numbers<[1], [0], [0], [1], [0, 0, 1, 1], [], []>} : vector<64x8xf32>, vector<8x128xf32>, vector<64x128xf32> -> vector<64x128xf32>
    %16 = arith.addf %12, %15 : vector<64x128xf32>
    %c0_13 = arith.constant 0 : index
    %c0_14 = arith.constant 0 : index
    %17 = vector.load %arg6[%c0_13, %c0_14] : memref<64x8xf32, #tpu.memory_space<vmem>>, vector<64x8xf32>
    %18 = math.cos %2 : vector<8x128xf32>
    %cst_15 = arith.constant dense<0.000000e+00> : vector<64x128xf32>
    %19 = tpu.matmul %17, %18, %cst_15 {dimension_numbers = #tpu.dot_dimension_numbers<[1], [0], [0], [1], [0, 0, 1, 1], [], []>} : vector<64x8xf32>, vector<8x128xf32>, vector<64x128xf32> -> vector<64x128xf32>
    %20 = arith.addf %16, %19 : vector<64x128xf32>
    %cst_16 = arith.constant 0.000000e+00 : f32
    %21 = vector.broadcast %cst_16 : f32 to vector<64x128xf32>
    %22 = arith.cmpf ogt, %20, %21 : vector<64x128xf32>
    %cst_17 = arith.constant 0.000000e+00 : f32
    %23 = vector.broadcast %cst_17 : f32 to vector<64x128xf32>
    %24 = arith.minimumf %20, %23 : vector<64x128xf32>
    %25 = math.exp %24 : vector<64x128xf32>
    %cst_18 = arith.constant 1.000000e+00 : f32
    %26 = vector.broadcast %cst_18 : f32 to vector<64x128xf32>
    %27 = arith.subf %25, %26 : vector<64x128xf32>
    %28 = arith.select %22, %20, %27 : vector<64x128xi1>, vector<64x128xf32>
    %c0_19 = arith.constant 0 : index
    %c0_20 = arith.constant 0 : index
    %29 = vector.load %arg7[%c0_19, %c0_20] : memref<13x64xf32, #tpu.memory_space<vmem>>, vector<13x64xf32>
    %cst_21 = arith.constant dense<0.000000e+00> : vector<13x128xf32>
    %30 = tpu.matmul %29, %28, %cst_21 {dimension_numbers = #tpu.dot_dimension_numbers<[1], [0], [0], [1], [0, 0, 1, 1], [], []>} : vector<13x64xf32>, vector<64x128xf32>, vector<13x128xf32> -> vector<13x128xf32>
    %c0_22 = arith.constant 0 : index
    %c0_23 = arith.constant 0 : index
    %31 = vector.load %arg8[%c0_22, %c0_23] : memref<13x1xf32, #tpu.memory_space<vmem>>, vector<13x1xf32>
    %32 = vector.broadcast %31 : vector<13x1xf32> to vector<13x128xf32>
    %33 = arith.addf %30, %32 : vector<13x128xf32>
    %c0_24 = arith.constant 0 : index
    %c0_25 = arith.constant 0 : index
    %34 = vector.load %arg9[%c0_24, %c0_25] : memref<4x64xf32, #tpu.memory_space<vmem>>, vector<4x64xf32>
    %cst_26 = arith.constant dense<0.000000e+00> : vector<4x128xf32>
    %35 = tpu.matmul %34, %28, %cst_26 {dimension_numbers = #tpu.dot_dimension_numbers<[1], [0], [0], [1], [0, 0, 1, 1], [], []>} : vector<4x64xf32>, vector<64x128xf32>, vector<4x128xf32> -> vector<4x128xf32>
    %cst_27 = arith.constant 0.000000e+00 : f32
    %36 = vector.broadcast %cst_27 : f32 to vector<4x128xf32>
    %37 = arith.maximumf %35, %36 : vector<4x128xf32>
    %38 = math.absf %35 : vector<4x128xf32>
    %cst_28 = arith.constant 0.000000e+00 : f32
    %39 = vector.broadcast %cst_28 : f32 to vector<4x128xf32>
    %40 = arith.subf %39, %38 : vector<4x128xf32>
    %41 = math.exp %40 : vector<4x128xf32>
    %42 = math.log1p %41 : vector<4x128xf32>
    %43 = arith.addf %37, %42 : vector<4x128xf32>
    %cst_29 = arith.constant 5.000000e-02 : f32
    %44 = vector.broadcast %cst_29 : f32 to vector<4x128xf32>
    %45 = arith.addf %43, %44 : vector<4x128xf32>
    %cst_30 = arith.constant dense<0.000000e+00> : vector<128xf32>
    %46 = vector.multi_reduction <add>, %45, %cst_30 [0] : vector<4x128xf32> to vector<128xf32>
    %47 = vector.shape_cast %46 : vector<128xf32> to vector<1x128xf32>
    %48 = tpu.reciprocal %47 {approx = true} : vector<1x128xf32> -> vector<1x128xf32>
    %49 = vector.broadcast %48 : vector<1x128xf32> to vector<4x128xf32>
    %50 = arith.mulf %45, %49 : vector<4x128xf32>
    %c0_31 = arith.constant 0 : index
    %c0_32 = arith.constant 0 : index
    %51 = vector.load %arg10[%c0_31, %c0_32] : memref<13x128xf32, #tpu.memory_space<vmem>>, vector<13x128xf32>
    tpu.vector_store %arg10[%c0_31, %c0_32], %33 {strides = array<i32>} : memref<13x128xf32, #tpu.memory_space<vmem>>, vector<13x128xf32>,
    %c0_33 = arith.constant 0 : index
    %c0_34 = arith.constant 0 : index
    %52 = vector.load %arg11[%c0_33, %c0_34] : memref<4x128xf32, #tpu.memory_space<vmem>>, vector<4x128xf32>
    tpu.vector_store %arg11[%c0_33, %c0_34], %50 {strides = array<i32>} : memref<4x128xf32, #tpu.memory_space<vmem>>, vector<4x128xf32>,
    return
  }
  func.func @transform_0(%arg0: i32) -> (i32, i32) {
    %c0_i32 = arith.constant 0 : i32
    %c0_i32_0 = arith.constant 0 : i32
    return %c0_i32, %arg0 : i32, i32
  }
  func.func @transform_1(%arg0: i32) -> (i32, i32) {
    %c0_i32 = arith.constant 0 : i32
    %c0_i32_0 = arith.constant 0 : i32
    %c0_i32_1 = arith.constant 0 : i32
    return %c0_i32, %c0_i32_0 : i32, i32
  }
  func.func @transform_2(%arg0: i32) -> (i32, i32) {
    %c0_i32 = arith.constant 0 : i32
    %c0_i32_0 = arith.constant 0 : i32
    %c0_i32_1 = arith.constant 0 : i32
    return %c0_i32, %c0_i32_0 : i32, i32
  }
  func.func @transform_3(%arg0: i32) -> (i32, i32) {
    %c0_i32 = arith.constant 0 : i32
    %c0_i32_0 = arith.constant 0 : i32
    %c0_i32_1 = arith.constant 0 : i32
    return %c0_i32, %c0_i32_0 : i32, i32
  }
  func.func @transform_4(%arg0: i32) -> (i32, i32) {
    %c0_i32 = arith.constant 0 : i32
    %c0_i32_0 = arith.constant 0 : i32
    %c0_i32_1 = arith.constant 0 : i32
    return %c0_i32, %c0_i32_0 : i32, i32
  }
  func.func @transform_5(%arg0: i32) -> (i32, i32) {
    %c0_i32 = arith.constant 0 : i32
    %c0_i32_0 = arith.constant 0 : i32
    %c0_i32_1 = arith.constant 0 : i32
    return %c0_i32, %c0_i32_0 : i32, i32
  }
  func.func @transform_6(%arg0: i32) -> (i32, i32) {
    %c0_i32 = arith.constant 0 : i32
    %c0_i32_0 = arith.constant 0 : i32
    %c0_i32_1 = arith.constant 0 : i32
    return %c0_i32, %c0_i32_0 : i32, i32
  }
  func.func @transform_7(%arg0: i32) -> (i32, i32) {
    %c0_i32 = arith.constant 0 : i32
    %c0_i32_0 = arith.constant 0 : i32
    %c0_i32_1 = arith.constant 0 : i32
    return %c0_i32, %c0_i32_0 : i32, i32
  }
  func.func @transform_8(%arg0: i32) -> (i32, i32) {
    %c0_i32 = arith.constant 0 : i32
    %c0_i32_0 = arith.constant 0 : i32
    %c0_i32_1 = arith.constant 0 : i32
    return %c0_i32, %c0_i32_0 : i32, i32
  }
  func.func @transform_9(%arg0: i32) -> (i32, i32) {
    %c0_i32 = arith.constant 0 : i32
    %c0_i32_0 = arith.constant 0 : i32
    return %c0_i32, %arg0 : i32, i32
  }
  func.func @transform_10(%arg0: i32) -> (i32, i32) {
    %c0_i32 = arith.constant 0 : i32
    %c0_i32_0 = arith.constant 0 : i32
    return %c0_i32, %arg0 : i32, i32
  }
}

</mosaic_0001>

<llo_original>
// kernel: tpu_custom_call.1
$region0: #{tpu_custom_call.1}
  #allocation0 [shape = 'u32[]', space=smem, size = 0x4, offset = 0x4, fixed_abs, tag = 'smem constant byte address 0x4 - core index']
  #allocation1 [shape = 'u32[144,128]{1,0:T(1,128)}', space=vmem, size = 0x12000, scoped, tag = 'internal scratch']
  %s0 = inlined_call_operand.vmem [shape: f32[8,256], index: 0, kind: input, shape index: {}]
  %s1 = inlined_call_operand.vmem [shape: f32[64,8], index: 1, kind: input, shape index: {}]
  %s2 = inlined_call_operand.vmem [shape: f32[64,8], index: 2, kind: input, shape index: {}]
  %s3 = inlined_call_operand.vmem [shape: f32[64,8], index: 3, kind: input, shape index: {}]
  %s4 = inlined_call_operand.vmem [shape: f32[64,8], index: 4, kind: input, shape index: {}]
  %s5 = inlined_call_operand.vmem [shape: f32[64,8], index: 5, kind: input, shape index: {}]
  %s6 = inlined_call_operand.vmem [shape: f32[13,64], index: 6, kind: input, shape index: {}]
  %s7 = inlined_call_operand.vmem [shape: f32[13,1], index: 7, kind: input, shape index: {}]
  %s8 = inlined_call_operand.vmem [shape: f32[4,64], index: 8, kind: input, shape index: {}]
  %s9 = inlined_call_operand.hbm [shape: f32[13,256], index: 9, kind: output, shape index: {0}]
  %s10 = inlined_call_operand.hbm [shape: f32[4,256], index: 10, kind: output, shape index: {1}]
  %11 = xla_tuple %s9, %s10
  %s12 = sld [smem:[#allocation0]]
  $region77: #{tpu_custom_call.1} parent=0
    _
  %s14 = ssub.s32 1, %s12
  %s15 = scalar_select 0, %s14, %s12
  $region1: #{tpu_custom_call.1} parent=0
    #allocation2 [shape = 'u8[16384]{0}', space=vmem, size = 0x4000, scoped, tag = 'output window, operand 0']
    #allocation3 [shape = 's32[2]{0}', space=sflag, size = 0x8, scoped, tag = 'scoped memory for tpu_custom_call.1']
    #allocation4 [shape = 'u8[4096]{0}', space=vmem, size = 0x1000, scoped, tag = 'output window, operand 1']
    #allocation5 [shape = 's32[2]{0}', space=sflag, size = 0x8, scoped, tag = 'scoped memory for tpu_custom_call.1']
    %16 = vsyncpa [#allocation3], 0
    %s17 = scalar_lea.sflag [#allocation3], 1
    %18 = vsyncpa %s17, 0
    %19 = vsyncpa [#allocation5], 0
    %s20 = scalar_lea.sflag [#allocation5], 1
    %21 = vsyncpa %s20, 0
    loop: start=0, step=1, limit=4
    $region2: #{tpu_custom_call.1} parent=1 // loop_pre_header
      _
    $region3: #{tpu_custom_call.1} parent=1 // loop_header
      %s23 = sphi 0, %s27
      %p24 = scmp.ge.s32.totalorder %s23, 4
      %s33 = sphi 0, %s35
      %s36 = sphi 0, %s33
      %s37 = sphi 0, %s36
      %s53 = sphi 0, %s37
      %s57 = sphi 0, %s57
      %s59 = sphi 0, %s57
      %s60 = sphi 0, %s59
      %s74 = sphi 0, %s60
      %s78 = sphi 0, %s78
      %s80 = sphi 0, %s78
      %s81 = sphi 0, %s80
      %s95 = sphi 0, %s81
      %s99 = sphi 0, %s99
      %s101 = sphi 0, %s99
      %s102 = sphi 0, %s101
      %s116 = sphi 0, %s102
      %s120 = sphi 0, %s120
      %s122 = sphi 0, %s120
      %s123 = sphi 0, %s122
      %s137 = sphi 0, %s123
      %s141 = sphi 0, %s141
      %s143 = sphi 0, %s141
      %s144 = sphi 0, %s143
      %s158 = sphi 0, %s144
      %s162 = sphi 0, %s162
      %s164 = sphi 0, %s162
      %s165 = sphi 0, %s164
      %s179 = sphi 0, %s165
      %s183 = sphi 0, %s183
      %s185 = sphi 0, %s183
      %s186 = sphi 0, %s185
      %s200 = sphi 0, %s186
      %s204 = sphi 0, %s204
      %s206 = sphi 0, %s204
      %s207 = sphi 0, %s206
      %s221 = sphi 0, %s207
      %s227 = sphi 0, %s229
      %s230 = sphi 0, %s227
      %s231 = sphi 0, %s230
      %s247 = sphi 0, %s231
      %s253 = sphi 0, %s255
      %s256 = sphi 0, %s253
      %s257 = sphi 0, %s256
      %s273 = sphi 0, %s257
    $region4: #{tpu_custom_call.1} parent=1 // loop_header_branch
      %26 = sbr.rel (%p24) target = $region8
    $region5: #{tpu_custom_call.1} parent=1 // loop_body
      %s28 = ssub.s32 %s23, 1
      %s29 = ssub.s32 %s23, 2
      %s30 = sadd.s32 %s23, 1
      %s31 = ssub.s32 %s23, %s30
      %p32 = scmp.eq.s32.totalorder %s31, 0
      %s34 = sadd.s32 %s33, 1
      %s35 = scalar_select %p32, %s33, %s34
      %p38 = pneg %p32
      %p39 = scmp.eq.s32.totalorder %s23, 1
      %p40 = por %p38, %p39
      %p41 = scmp.ne.s32.totalorder %s33, %s36
      %p42 = scmp.eq.s32.totalorder %s23, 0
      %p43 = por %p41, %p42
      %p44 = scmp.ne.s32.totalorder %s33, %s36
      %p45 = scmp.eq.s32.totalorder %s28, 1
      %p46 = por %p44, %p45
      %p47 = scmp.ne.s32.totalorder %s36, %s37
      %p48 = scmp.eq.s32.totalorder %s28, 0
      %p49 = por %p47, %p48
      %p50 = scmp.ne.s32.totalorder %s36, %s37
      %p51 = scmp.eq.s32.totalorder %s29, 1
      %p52 = por %p50, %p51
      %p54 = scmp.ne.s32.totalorder %s37, %s53
      %p55 = scmp.eq.s32.totalorder %s29, 0
      %p56 = por %p54, %p55
      %s58 = sadd.s32 %s57, 1
      %p61 = scmp.eq.s32.totalorder %s23, 1
      %p62 = scmp.ne.s32.totalorder %s57, %s59
      %p63 = scmp.eq.s32.totalorder %s23, 0
      %p64 = por %p62, %p63
      %p65 = scmp.ne.s32.totalorder %s57, %s59
      %p66 = scmp.eq.s32.totalorder %s28, 1
      %p67 = por %p65, %p66
      %p68 = scmp.ne.s32.totalorder %s59, %s60
      %p69 = scmp.eq.s32.totalorder %s28, 0
      %p70 = por %p68, %p69
      %p71 = scmp.ne.s32.totalorder %s59, %s60
      %p72 = scmp.eq.s32.totalorder %s29, 1
      %p73 = por %p71, %p72
      %p75 = scmp.ne.s32.totalorder %s60, %s74
      %p76 = scmp.eq.s32.totalorder %s29, 0
      %p77 = por %p75, %p76
      %s79 = sadd.s32 %s78, 1
      %p82 = scmp.eq.s32.totalorder %s23, 1
      %p83 = scmp.ne.s32.totalorder %s78, %s80
      %p84 = scmp.eq.s32.totalorder %s23, 0
      %p85 = por %p83, %p84
      %p86 = scmp.ne.s32.totalorder %s78, %s80
      %p87 = scmp.eq.s32.totalorder %s28, 1
      %p88 = por %p86, %p87
      %p89 = scmp.ne.s32.totalorder %s80, %s81
      %p90 = scmp.eq.s32.totalorder %s28, 0
      %p91 = por %p89, %p90
      %p92 = scmp.ne.s32.totalorder %s80, %s81
      %p93 = scmp.eq.s32.totalorder %s29, 1
      %p94 = por %p92, %p93
      %p96 = scmp.ne.s32.totalorder %s81, %s95
      %p97 = scmp.eq.s32.totalorder %s29, 0
      %p98 = por %p96, %p97
      %s100 = sadd.s32 %s99, 1
      %p103 = scmp.eq.s32.totalorder %s23, 1
      %p104 = scmp.ne.s32.totalorder %s99, %s101
      %p105 = scmp.eq.s32.totalorder %s23, 0
      %p106 = por %p104, %p105
      %p107 = scmp.ne.s32.totalorder %s99, %s101
      %p108 = scmp.eq.s32.totalorder %s28, 1
      %p109 = por %p107, %p108
      %p110 = scmp.ne.s32.totalorder %s101, %s102
      %p111 = scmp.eq.s32.totalorder %s28, 0
      %p112 = por %p110, %p111
      %p113 = scmp.ne.s32.totalorder %s101, %s102
      %p114 = scmp.eq.s32.totalorder %s29, 1
      %p115 = por %p113, %p114
      %p117 = scmp.ne.s32.totalorder %s102, %s116
      %p118 = scmp.eq.s32.totalorder %s29, 0
      %p119 = por %p117, %p118
      %s121 = sadd.s32 %s120, 1
      %p124 = scmp.eq.s32.totalorder %s23, 1
      %p125 = scmp.ne.s32.totalorder %s120, %s122
      %p126 = scmp.eq.s32.totalorder %s23, 0
      %p127 = por %p125, %p126
      %p128 = scmp.ne.s32.totalorder %s120, %s122
      %p129 = scmp.eq.s32.totalorder %s28, 1
      %p130 = por %p128, %p129
      %p131 = scmp.ne.s32.totalorder %s122, %s123
      %p132 = scmp.eq.s32.totalorder %s28, 0
      %p133 = por %p131, %p132
      %p134 = scmp.ne.s32.totalorder %s122, %s123
      %p135 = scmp.eq.s32.totalorder %s29, 1
      %p136 = por %p134, %p135
      %p138 = scmp.ne.s32.totalorder %s123, %s137
      %p139 = scmp.eq.s32.totalorder %s29, 0
      %p140 = por %p138, %p139
      %s142 = sadd.s32 %s141, 1
      %p145 = scmp.eq.s32.totalorder %s23, 1
      %p146 = scmp.ne.s32.totalorder %s141, %s143
      %p147 = scmp.eq.s32.totalorder %s23, 0
      %p148 = por %p146, %p147
      %p149 = scmp.ne.s32.totalorder %s141, %s143
      %p150 = scmp.eq.s32.totalorder %s28, 1
      %p151 = por %p149, %p150
      %p152 = scmp.ne.s32.totalorder %s143, %s144
      %p153 = scmp.eq.s32.totalorder %s28, 0
      %p154 = por %p152, %p153
      %p155 = scmp.ne.s32.totalorder %s143, %s144
      %p156 = scmp.eq.s32.totalorder %s29, 1
      %p157 = por %p155, %p156
      %p159 = scmp.ne.s32.totalorder %s144, %s158
      %p160 = scmp.eq.s32.totalorder %s29, 0
      %p161 = por %p159, %p160
      %s163 = sadd.s32 %s162, 1
      %p166 = scmp.eq.s32.totalorder %s23, 1
      %p167 = scmp.ne.s32.totalorder %s162, %s164
      %p168 = scmp.eq.s32.totalorder %s23, 0
      %p169 = por %p167, %p168
      %p170 = scmp.ne.s32.totalorder %s162, %s164
      %p171 = scmp.eq.s32.totalorder %s28, 1
      %p172 = por %p170, %p171
      %p173 = scmp.ne.s32.totalorder %s164, %s165
      %p174 = scmp.eq.s32.totalorder %s28, 0
      %p175 = por %p173, %p174
      %p176 = scmp.ne.s32.totalorder %s164, %s165
      %p177 = scmp.eq.s32.totalorder %s29, 1
      %p178 = por %p176, %p177
      %p180 = scmp.ne.s32.totalorder %s165, %s179
      %p181 = scmp.eq.s32.totalorder %s29, 0
      %p182 = por %p180, %p181
      %s184 = sadd.s32 %s183, 1
      %p187 = scmp.eq.s32.totalorder %s23, 1
      %p188 = scmp.ne.s32.totalorder %s183, %s185
      %p189 = scmp.eq.s32.totalorder %s23, 0
      %p190 = por %p188, %p189
      %p191 = scmp.ne.s32.totalorder %s183, %s185
      %p192 = scmp.eq.s32.totalorder %s28, 1
      %p193 = por %p191, %p192
      %p194 = scmp.ne.s32.totalorder %s185, %s186
      %p195 = scmp.eq.s32.totalorder %s28, 0
      %p196 = por %p194, %p195
      %p197 = scmp.ne.s32.totalorder %s185, %s186
      %p198 = scmp.eq.s32.totalorder %s29, 1
      %p199 = por %p197, %p198
      %p201 = scmp.ne.s32.totalorder %s186, %s200
      %p202 = scmp.eq.s32.totalorder %s29, 0
      %p203 = por %p201, %p202
      %s205 = sadd.s32 %s204, 1
      %p208 = scmp.eq.s32.totalorder %s23, 1
      %p209 = scmp.ne.s32.totalorder %s204, %s206
      %p210 = scmp.eq.s32.totalorder %s23, 0
      %p211 = por %p209, %p210
      %p212 = scmp.ne.s32.totalorder %s204, %s206
      %p213 = scmp.eq.s32.totalorder %s28, 1
      %p214 = por %p212, %p213
      %p215 = scmp.ne.s32.totalorder %s206, %s207
      %p216 = scmp.eq.s32.totalorder %s28, 0
      %p217 = por %p215, %p216
      %p218 = scmp.ne.s32.totalorder %s206, %s207
      %p219 = scmp.eq.s32.totalorder %s29, 1
      %p220 = por %p218, %p219
      %p222 = scmp.ne.s32.totalorder %s207, %s221
      %p223 = scmp.eq.s32.totalorder %s29, 0
      %p224 = por %p222, %p223
      %s225 = ssub.s32 %s23, %s30
      %p226 = scmp.eq.s32.totalorder %s225, 0
      %s228 = sadd.s32 %s227, 1
      %s229 = scalar_select %p226, %s227, %s228
      %p232 = pneg %p226
      %p233 = scmp.eq.s32.totalorder %s23, 1
      %p234 = por %p232, %p233
      %p235 = scmp.ne.s32.totalorder %s227, %s230
      %p236 = scmp.eq.s32.totalorder %s23, 0
      %p237 = por %p235, %p236
      %p238 = scmp.ne.s32.totalorder %s227, %s230
      %p239 = scmp.eq.s32.totalorder %s28, 1
      %p240 = por %p238, %p239
      %p241 = scmp.ne.s32.totalorder %s230, %s231
      %p242 = scmp.eq.s32.totalorder %s28, 0
      %p243 = por %p241, %p242
      %p244 = scmp.ne.s32.totalorder %s230, %s231
      %p245 = scmp.eq.s32.totalorder %s29, 1
      %p246 = por %p244, %p245
      %p248 = scmp.ne.s32.totalorder %s231, %s247
      %p249 = scmp.eq.s32.totalorder %s29, 0
      %p250 = por %p248, %p249
      %s251 = ssub.s32 %s23, %s30
      %p252 = scmp.eq.s32.totalorder %s251, 0
      %s254 = sadd.s32 %s253, 1
      %s255 = scalar_select %p252, %s253, %s254
      %p258 = pneg %p252
      %p259 = scmp.eq.s32.totalorder %s23, 1
      %p260 = por %p258, %p259
      %p261 = scmp.ne.s32.totalorder %s253, %s256
      %p262 = scmp.eq.s32.totalorder %s23, 0
      %p263 = por %p261, %p262
      %p264 = scmp.ne.s32.totalorder %s253, %s256
      %p265 = scmp.eq.s32.totalorder %s28, 1
      %p266 = por %p264, %p265
      %p267 = scmp.ne.s32.totalorder %s256, %s257
      %p268 = scmp.eq.s32.totalorder %s28, 0
      %p269 = por %p267, %p268
      %p270 = scmp.ne.s32.totalorder %s256, %s257
      %p271 = scmp.eq.s32.totalorder %s29, 1
      %p272 = por %p270, %p271
      %p274 = scmp.ne.s32.totalorder %s257, %s273
      %p275 = scmp.eq.s32.totalorder %s29, 0
      %p276 = por %p274, %p275
      %p277 = scmp.le.s32.totalorder 1, %s23
      %p278 = scmp.lt.s32.totalorder %s23, 3
      %p279 = pnand %p277, %p278
      %p280 = pneg %p279
      // Predicated region
      $region9: #{tpu_custom_call.1} parent=5 // pred_check
        _
      $region10: #{tpu_custom_call.1} parent=5 // pred_check_branch
        %282 = sbr.rel (%p279) target = $region12
      $region11: #{tpu_custom_call.1} parent=5 // pred_region
        %s283 = ssub.s32 %s23, 1
        // Predicated region
        $region13: #{tpu_custom_call.1} parent=11 // pred_check
          %p284 = pneg %p70
        $region14: #{tpu_custom_call.1} parent=11 // pred_check_branch
          %286 = sbr.rel (%p284) target = $region16
        $region15: #{tpu_custom_call.1} parent=11 // pred_region
          _
        $region16: #{tpu_custom_call.1} parent=11 // pred_fallthru
          _
        // Predicated region
        $region17: #{tpu_custom_call.1} parent=11 // pred_check
          %p287 = pneg %p91
        $region18: #{tpu_custom_call.1} parent=11 // pred_check_branch
          %289 = sbr.rel (%p287) target = $region20
        $region19: #{tpu_custom_call.1} parent=11 // pred_region
          _
        $region20: #{tpu_custom_call.1} parent=11 // pred_fallthru
          _
        // Predicated region
        $region21: #{tpu_custom_call.1} parent=11 // pred_check
          %p290 = pneg %p112
        $region22: #{tpu_custom_call.1} parent=11 // pred_check_branch
          %292 = sbr.rel (%p290) target = $region24
        $region23: #{tpu_custom_call.1} parent=11 // pred_region
          _
        $region24: #{tpu_custom_call.1} parent=11 // pred_fallthru
          _
        // Predicated region
        $region25: #{tpu_custom_call.1} parent=11 // pred_check
          %p293 = pneg %p133
        $region26: #{tpu_custom_call.1} parent=11 // pred_check_branch
          %295 = sbr.rel (%p293) target = $region28
        $region27: #{tpu_custom_call.1} parent=11 // pred_region
          _
        $region28: #{tpu_custom_call.1} parent=11 // pred_fallthru
          _
        // Predicated region
        $region29: #{tpu_custom_call.1} parent=11 // pred_check
          %p296 = pneg %p154
        $region30: #{tpu_custom_call.1} parent=11 // pred_check_branch
          %298 = sbr.rel (%p296) target = $region32
        $region31: #{tpu_custom_call.1} parent=11 // pred_region
          _
        $region32: #{tpu_custom_call.1} parent=11 // pred_fallthru
          _
        // Predicated region
        $region33: #{tpu_custom_call.1} parent=11 // pred_check
          %p299 = pneg %p175
        $region34: #{tpu_custom_call.1} parent=11 // pred_check_branch
          %301 = sbr.rel (%p299) target = $region36
        $region35: #{tpu_custom_call.1} parent=11 // pred_region
          _
        $region36: #{tpu_custom_call.1} parent=11 // pred_fallthru
          _
        // Predicated region
        $region37: #{tpu_custom_call.1} parent=11 // pred_check
          %p302 = pneg %p196
        $region38: #{tpu_custom_call.1} parent=11 // pred_check_branch
          %304 = sbr.rel (%p302) target = $region40
        $region39: #{tpu_custom_call.1} parent=11 // pred_region
          _
        $region40: #{tpu_custom_call.1} parent=11 // pred_fallthru
          _
        // Predicated region
        $region41: #{tpu_custom_call.1} parent=11 // pred_check
          %p305 = pneg %p217
        $region42: #{tpu_custom_call.1} parent=11 // pred_check_branch
          %307 = sbr.rel (%p305) target = $region44
        $region43: #{tpu_custom_call.1} parent=11 // pred_region
          _
        $region44: #{tpu_custom_call.1} parent=11 // pred_fallthru
          _
      $region12: #{tpu_custom_call.1} parent=5 // pred_fallthru
        _
      %p308 = scmp.lt.s32.totalorder %s23, 2
      // Predicated region
      $region45: #{tpu_custom_call.1} parent=5 // pred_check
        %p309 = pneg %p308
      $region46: #{tpu_custom_call.1} parent=5 // pred_check_branch
        %311 = sbr.rel (%p309) target = $region48
      $region47: #{tpu_custom_call.1} parent=5 // pred_region
        // Predicated region
        $region49: #{tpu_custom_call.1} parent=47 // pred_check
          %p312 = pneg %p43
        $region50: #{tpu_custom_call.1} parent=47 // pred_check_branch
          %314 = sbr.rel (%p312) target = $region52
        $region51: #{tpu_custom_call.1} parent=47 // pred_region
          %p315 = scmp.lt.s32.totalorder %s23, 1
          %s316 = scalar_select %p315, %s23, 1
          %s317 = smul.addr %s316, 8
          %s318 = scalar_lea.vmem %s0, %s317
        $region52: #{tpu_custom_call.1} parent=47 // pred_fallthru
          _
      $region48: #{tpu_custom_call.1} parent=5 // pred_fallthru
        _
      %p319 = scmp.le.s32.totalorder 1, %s23
      %p320 = scmp.lt.s32.totalorder %s23, 3
      %p321 = pnand %p319, %p320
      %p322 = pneg %p321
      // Predicated region
      $region53: #{tpu_custom_call.1} parent=5 // pred_check
        _
      $region54: #{tpu_custom_call.1} parent=5 // pred_check_branch
        %324 = sbr.rel (%p321) target = $region56
      $region55: #{tpu_custom_call.1} parent=5 // pred_region
        %s325 = ssub.s32 %s23, 1
        %p326 = scmp.lt.s32.totalorder %s28, 1
        %s327 = scalar_select %p326, %s28, 1
        %s328 = smul.addr %s327, 8
        %s329 = scalar_lea.vmem %s0, %s328
        %p330 = pneg %p49
        %p331 = pneg %p46
        %p332 = pneg %p70
        %p333 = pneg %p67
        %p334 = pneg %p91
        %p335 = pneg %p88
        %p336 = pneg %p112
        %p337 = pneg %p109
        %p338 = pneg %p133
        %p339 = pneg %p130
        %p340 = pneg %p154
        %p341 = pneg %p151
        %p342 = pneg %p175
        %p343 = pneg %p172
        %p344 = pneg %p196
        %p345 = pneg %p193
        %p346 = pneg %p217
        %p347 = pneg %p214
        %p348 = pneg %p243
        %p349 = pneg %p240
        %s350 = sand.u32 %s230, 1
        %s351 = scalar_lea.sflag [#allocation3], %s350
        %s352 = sand.u32 %s230, 1
        %s353 = smul.addr %s352, 16
        %s354 = scalar_lea.vmem [#allocation2], %s353
        %p355 = pneg %p269
        %p356 = pneg %p266
        %s357 = sand.u32 %s256, 1
        %s358 = scalar_lea.sflag [#allocation5], %s357
        %s359 = sand.u32 %s256, 1
        %s360 = smul.addr %s359, 4
        %s361 = scalar_lea.vmem [#allocation4], %s360
        %p362 = scmp.lt.s32.totalorder %s28, 1
        %s363 = scalar_select %p362, %s28, 1
        %s364 = smul.addr %s363, 8
        %s365 = scalar_lea.vmem %s0, %s364
        %v366 = vld [vmem:[%s365] sm:$0xff]
        %v367 = vmul.f32 %v366, 2.0
        %v368 = vld [vmem:[%s1] sm:$0xff]
        %v369 = vld [vmem:[%s1 + $0x8] sm:$0xff]
        %v370 = vld [vmem:[%s1 + $0x10] sm:$0xff]
        %v371 = vld [vmem:[%s1 + $0x18] sm:$0xff]
        %v372 = vld [vmem:[%s1 + $0x20] sm:$0xff]
        %v373 = vld [vmem:[%s1 + $0x28] sm:$0xff]
        %v374 = vld [vmem:[%s1 + $0x30] sm:$0xff]
        %v375 = vld [vmem:[%s1 + $0x38] sm:$0xff]
        %v376 = vld [vmem:[%s2] sm:$0xff]
        %v377 = vld [vmem:[%s2 + $0x8] sm:$0xff]
        %v378 = vld [vmem:[%s2 + $0x10] sm:$0xff]
        %v379 = vld [vmem:[%s2 + $0x18] sm:$0xff]
        %v380 = vld [vmem:[%s2 + $0x20] sm:$0xff]
        %v381 = vld [vmem:[%s2 + $0x28] sm:$0xff]
        %v382 = vld [vmem:[%s2 + $0x30] sm:$0xff]
        %v383 = vld [vmem:[%s2 + $0x38] sm:$0xff]
        %v384 = vand.u32 2147483647, %v366
        %vm385 = vcmp.le.f32.partialorder %v384, 0.7853982
        %vm386 = vcmp.lt.s32.totalorder %v366, 0
        %v387 = vand.u32 %v366, 2139095040
        %v388 = vshrl.u32 %v387, 23
        %v389 = vsub.s32 %v388, 127
        %v390 = vand.u32 2147483647, %v366
        %v391 = vand.u32 %v390, 8388607
        %v392 = vor.u32 %v391, 8388608
        %v393 = vsub.s32 0, %v392
        %v394 = vadd.s32 %v389, 1
        %vm395 = vcmp.gt.s32.totalorder %v394, 0
        %v396 = vsel %vm395, %v394, 0
        %v397 = vshrl.u32 %v396, 5
        %v398 = vand.u32 %v396, 31
        %v399 = vsub.s32 32, %v398
        %v400 = vshrl.u32 683565275, %v399
        %v401 = vshll.u32 683565275, %v398
        %v402 = vshrl.u32 2475754826, %v399
        %v403 = vor.u32 %v401, %v402
        %v404 = vshll.u32 2475754826, %v398
        %v405 = vshrl.u32 2131351028, %v399
        %v406 = vor.u32 %v404, %v405
        %v407 = vshll.u32 2131351028, %v398
        %v408 = vshrl.u32 2102212464, %v399
        %v409 = vor.u32 %v407, %v408
        %v410 = vshll.u32 2102212464, %v398
        %v411 = vshrl.u32 920167782, %v399
        %v412 = vor.u32 %v410, %v411
        %v413 = vshll.u32 920167782, %v398
        %v414 = vshrl.u32 1326507024, %v399
        %v415 = vor.u32 %v413, %v414
        %vm416 = vcmp.lt.s32.totalorder %v397, 1
        %vm417 = vcmp.lt.s32.totalorder %v397, 2
        %vm418 = vcmp.lt.s32.totalorder %v397, 3
        %vm419 = vcmp.lt.s32.totalorder %v397, 4
        %v420 = vsel %vm416, %v400, %v403
        %v421 = vsel %vm419, %v409, 2102212464
        %v422 = vsel %vm418, %v406, %v421
        %v423 = vsel %vm417, %v420, %v422
        %v424 = vsel %vm416, %v403, %v406
        %v425 = vsel %vm419, %v412, 920167782
        %v426 = vsel %vm418, %v409, %v425
        %v427 = vsel %vm417, %v424, %v426
        %v428 = vsel %vm416, %v406, %v409
        %v429 = vsel %vm419, %v415, 1326507024
        %v430 = vsel %vm418, %v412, %v429
        %v431 = vsel %vm417, %v428, %v430
        %v432 = vshll.u32 %v392, 8
        %v433 = vmul.u32.u64.compose %v432, %v431
        %v434 = vextract.low.u32 %v433
        %v435 = vextract.high.u32 %v433
        %v436 = vmul.u32.u64.compose %v432, %v427
        %v437 = vextract.low.u32 %v436
        %v438 = vextract.high.u32 %v436
        %v439 = vmul.u32 %v432, %v423
        %v440 = vadd.s32 %v435, %v437
        %vm441 = vc.u32 %v435, %v437
        %v442 = vadd.s32 %v438, 1
        %v443 = vsel %vm441, %v442, %v438
        %v444 = vadd.s32 %v439, %v443
        %v445 = vadd.s32 %v444, 536870912
        %v446 = vshrl.u32 %v445, 30
        %v447 = vshll.u32 %v446, 30
        %v448 = vsub.s32 %v444, %v447
        %vm449 = vcmp.lt.s32.totalorder %v448, 0
        %v450 = vsub.s32 0, %v448
        %v451 = vsel %vm449, %v450, %v448
        %v452 = vclz %v451
        %v453 = vsub.s32 %v452, 2
        %vm454 = vcmp.gt.s32.totalorder 0, %v453
        %v455 = vsel %vm454, 0, %v453
        %v456 = vsub.s32 32, %v455
        %v457 = vshll.u32 %v448, %v455
        %v458 = vshrl.u32 %v440, %v456
        %v459 = vor.u32 %v457, %v458
        %v460 = vsub.s32 4294967266, %v455
        %v461 = vadd.s32 %v460, 127
        %v462 = vshll.u32 %v461, 23
        %v463 = vor.u32 4788187, %v462
        %v464 = vand.u32 2147483647, %v463
        %v466 = vcvt.s32.f32 %v459
        %v467 = vmul.f32 %v466, %v464
        %v468 = vxor.u32 %v467, 2147483648
        %v469 = vsel %vm386, %v468, %v467
        %v470 = vsub.s32 4, %v446
        %v471 = vsel %vm386, %v470, %v446
        %v472 = vsel %vm385, %v366, %v469
        %v473 = vsel %vm385, 0, %v471
        %v474 = vcosq.f32.pop %v472
        %v475 = vsinq.f32.pop %v472
        %vm476 = vweird.f32 %v366
        %v477 = vadd.s32 %v473, 3
        %v478 = vand.u32 %v477, 3
        %vm479 = vcmp.lt.s32.totalorder %v478, 2
        %vm480 = vcmp.eq.s32.totalorder %v478, 0
        %v481 = vxor.u32 %v475, 2147483648
        %v482 = vsel %vm480, %v474, %v481
        %vm483 = vcmp.eq.s32.totalorder %v478, 2
        %v484 = vxor.u32 %v474, 2147483648
        %v485 = vsel %vm483, %v484, %v475
        %v486 = vsel %vm479, %v482, %v485
        %v487 = vsel %vm476, nan, %v486
        %vm488 = vcmask 64512
        %v490 = vsel %vm488, %v376, 0
        %v493 = vsel %vm488, %v377, 0
        %v496 = vsel %vm488, %v378, 0
        %v499 = vsel %vm488, %v379, 0
        %v502 = vsel %vm488, %v380, 0
        %v505 = vsel %vm488, %v381, 0
        %v508 = vsel %vm488, %v382, 0
        %v511 = vsel %vm488, %v383, 0
        %513 = vmatprep.subr.mxu0 0.0
        %514 = vmatpush1.msra.mxu0 0.0
        %515 = vmatprep.subr.mxu0 0.0
        %516 = vmatpush1.msra.mxu0 0.0
        %517 = vmatprep.subr.mxu0 0.0
        %518 = vmatpush1.msra.mxu0 0.0
        %519 = vmatprep.subr.mxu0 0.0
        %520 = vmatpush1.msra.mxu0 0.0
        %521 = vmatprep.subr.mxu0 0.0
        %522 = vmatpush1.msra.mxu0 0.0
        %523 = vmatprep.subr.mxu0 0.0
        %524 = vmatpush1.msra.mxu0 0.0
        %525 = vmatprep.subr.mxu0 0.0
        %526 = vmatpush1.msra.mxu0 0.0
        %527 = vmatprep.subr.mxu0 0.0
        %528 = vmatpush1.msra.mxu0 0.0
        %529 = vmatprep.subr.mxu0 0.0
        %530 = vmatpush1.msra.mxu0 0.0
        %531 = vmatprep.subr.mxu0 0.0
        %532 = vmatpush1.msra.mxu0 0.0
        %533 = vmatprep.subr.mxu0 0.0
        %534 = vmatpush1.msra.mxu0 0.0
        %535 = vmatprep.subr.mxu0 0.0
        %536 = vmatpush1.msra.mxu0 0.0
        %537 = vmatprep.subr.mxu0 0.0
        %538 = vmatpush1.msra.mxu0 0.0
        %539 = vmatprep.subr.mxu0 0.0
        %540 = vmatpush1.msra.mxu0 0.0
        %541 = vmatprep.subr.mxu0 0.0
        %542 = vmatpush1.msra.mxu0 0.0
        %543 = vmatprep.subr.mxu0 0.0
        %544 = vmatpush1.msra.mxu0 %v487
        %545 = vmatprep.subr.mxu0 0.0
        %546 = vmatpush2.msra.mxu0 0.0
        %547 = vmatprep.subr.mxu0 0.0
        %548 = vmatpush2.msra.mxu0 0.0
        %549 = vmatprep.subr.mxu0 0.0
        %550 = vmatpush2.msra.mxu0 0.0
        %551 = vmatprep.subr.mxu0 0.0
        %552 = vmatpush2.msra.mxu0 0.0
        %553 = vmatprep.subr.mxu0 0.0
        %554 = vmatpush2.msra.mxu0 0.0
        %555 = vmatprep.subr.mxu0 0.0
        %556 = vmatpush2.msra.mxu0 0.0
        %557 = vmatprep.subr.mxu0 0.0
        %558 = vmatpush2.msra.mxu0 0.0
        %559 = vmatprep.subr.mxu0 0.0
        %560 = vmatpush2.msra.mxu0 0.0
        %561 = vmatprep.subr.mxu0 0.0
        %562 = vmatpush2.msra.mxu0 0.0
        %563 = vmatprep.subr.mxu0 0.0
        %564 = vmatpush2.msra.mxu0 0.0
        %565 = vmatprep.subr.mxu0 0.0
        %566 = vmatpush2.msra.mxu0 0.0
        %567 = vmatprep.subr.mxu0 0.0
        %568 = vmatpush2.msra.mxu0 0.0
        %569 = vmatprep.subr.mxu0 0.0
        %570 = vmatpush2.msra.mxu0 0.0
        %571 = vmatprep.subr.mxu0 0.0
        %572 = vmatpush2.msra.mxu0 0.0
        %573 = vmatprep.subr.mxu0 0.0
        %574 = vmatpush2.msra.mxu0 0.0
        %575 = vmatprep.subr.mxu0 0.0
        %576 = vmatpush2.msra.mxu0 0.0
        %577 = vmatprep.mubr.f32.mxu0 0.0
        %578 = vmatmul.mubr.f32.gmra.mxu0 %v490
        %v579 = vpop.f32.mrf.mxu0
        %v580 = vadd.f32 0.0, %v579
        %v581 = vpop.f32.mrf.mxu0
        %582 = vmatprep.mubr.f32.mxu0 0.0
        %583 = vmatmul.mubr.f32.gmra.mxu0 %v493
        %v584 = vpop.f32.mrf.mxu0
        %v585 = vadd.f32 0.0, %v584
        %v586 = vpop.f32.mrf.mxu0
        %587 = vmatprep.mubr.f32.mxu0 0.0
        %588 = vmatmul.mubr.f32.gmra.mxu0 %v496
        %v589 = vpop.f32.mrf.mxu0
        %v590 = vadd.f32 0.0, %v589
        %v591 = vpop.f32.mrf.mxu0
        %592 = vmatprep.mubr.f32.mxu0 0.0
        %593 = vmatmul.mubr.f32.gmra.mxu0 %v499
        %v594 = vpop.f32.mrf.mxu0
        %v595 = vadd.f32 0.0, %v594
        %v596 = vpop.f32.mrf.mxu0
        %597 = vmatprep.mubr.f32.mxu0 0.0
        %598 = vmatmul.mubr.f32.gmra.mxu0 %v502
        %v599 = vpop.f32.mrf.mxu0
        %v600 = vadd.f32 0.0, %v599
        %v601 = vpop.f32.mrf.mxu0
        %602 = vmatprep.mubr.f32.mxu0 0.0
        %603 = vmatmul.mubr.f32.gmra.mxu0 %v505
        %v604 = vpop.f32.mrf.mxu0
        %v605 = vadd.f32 0.0, %v604
        %v606 = vpop.f32.mrf.mxu0
        %607 = vmatprep.mubr.f32.mxu0 0.0
        %608 = vmatmul.mubr.f32.gmra.mxu0 %v508
        %v609 = vpop.f32.mrf.mxu0
        %v610 = vadd.f32 0.0, %v609
        %v611 = vpop.f32.mrf.mxu0
        %612 = vmatprep.mubr.f32.mxu0 0.0
        %613 = vmatmul.mubr.f32.gmra.mxu0 %v511
        %v614 = vpop.f32.mrf.mxu0
        %v615 = vadd.f32 0.0, %v614
        %v616 = vpop.f32.mrf.mxu0
        %617 = vdwg.mxu0
        %v619 = vsel %vm488, %v368, 0
        %v622 = vsel %vm488, %v369, 0
        %v625 = vsel %vm488, %v370, 0
        %v628 = vsel %vm488, %v371, 0
        %v631 = vsel %vm488, %v372, 0
        %v634 = vsel %vm488, %v373, 0
        %v637 = vsel %vm488, %v374, 0
        %v640 = vsel %vm488, %v375, 0
        %642 = vmatprep.subr.mxu0 0.0
        %643 = vmatpush1.msra.mxu0 0.0
        %644 = vmatprep.subr.mxu0 0.0
        %645 = vmatpush1.msra.mxu0 0.0
        %646 = vmatprep.subr.mxu0 0.0
        %647 = vmatpush1.msra.mxu0 0.0
        %648 = vmatprep.subr.mxu0 0.0
        %649 = vmatpush1.msra.mxu0 0.0
        %650 = vmatprep.subr.mxu0 0.0
        %651 = vmatpush1.msra.mxu0 0.0
        %652 = vmatprep.subr.mxu0 0.0
        %653 = vmatpush1.msra.mxu0 0.0
        %654 = vmatprep.subr.mxu0 0.0
        %655 = vmatpush1.msra.mxu0 0.0
        %656 = vmatprep.subr.mxu0 0.0
        %657 = vmatpush1.msra.mxu0 0.0
        %658 = vmatprep.subr.mxu0 0.0
        %659 = vmatpush1.msra.mxu0 0.0
        %660 = vmatprep.subr.mxu0 0.0
        %661 = vmatpush1.msra.mxu0 0.0
        %662 = vmatprep.subr.mxu0 0.0
        %663 = vmatpush1.msra.mxu0 0.0
        %664 = vmatprep.subr.mxu0 0.0
        %665 = vmatpush1.msra.mxu0 0.0
        %666 = vmatprep.subr.mxu0 0.0
        %667 = vmatpush1.msra.mxu0 0.0
        %668 = vmatprep.subr.mxu0 0.0
        %669 = vmatpush1.msra.mxu0 0.0
        %670 = vmatprep.subr.mxu0 0.0
        %671 = vmatpush1.msra.mxu0 0.0
        %672 = vmatprep.subr.mxu0 0.0
        %673 = vmatpush1.msra.mxu0 %v366
        %674 = vmatprep.subr.mxu0 0.0
        %675 = vmatpush2.msra.mxu0 0.0
        %676 = vmatprep.subr.mxu0 0.0
        %677 = vmatpush2.msra.mxu0 0.0
        %678 = vmatprep.subr.mxu0 0.0
        %679 = vmatpush2.msra.mxu0 0.0
        %680 = vmatprep.subr.mxu0 0.0
        %681 = vmatpush2.msra.mxu0 0.0
        %682 = vmatprep.subr.mxu0 0.0
        %683 = vmatpush2.msra.mxu0 0.0
        %684 = vmatprep.subr.mxu0 0.0
        %685 = vmatpush2.msra.mxu0 0.0
        %686 = vmatprep.subr.mxu0 0.0
        %687 = vmatpush2.msra.mxu0 0.0
        %688 = vmatprep.subr.mxu0 0.0
        %689 = vmatpush2.msra.mxu0 0.0
        %690 = vmatprep.subr.mxu0 0.0
        %691 = vmatpush2.msra.mxu0 0.0
        %692 = vmatprep.subr.mxu0 0.0
        %693 = vmatpush2.msra.mxu0 0.0
        %694 = vmatprep.subr.mxu0 0.0
        %695 = vmatpush2.msra.mxu0 0.0
        %696 = vmatprep.subr.mxu0 0.0
        %697 = vmatpush2.msra.mxu0 0.0
        %698 = vmatprep.subr.mxu0 0.0
        %699 = vmatpush2.msra.mxu0 0.0
        %700 = vmatprep.subr.mxu0 0.0
        %701 = vmatpush2.msra.mxu0 0.0
        %702 = vmatprep.subr.mxu0 0.0
        %703 = vmatpush2.msra.mxu0 0.0
        %704 = vmatprep.subr.mxu0 0.0
        %705 = vmatpush2.msra.mxu0 0.0
        %706 = vmatprep.mubr.f32.mxu0 0.0
        %707 = vmatmul.mubr.f32.gmra.mxu0 %v619
        %v708 = vpop.f32.mrf.mxu0
        %v709 = vadd.f32 %v580, %v708
        %v710 = vpop.f32.mrf.mxu0
        %711 = vmatprep.mubr.f32.mxu0 0.0
        %712 = vmatmul.mubr.f32.gmra.mxu0 %v622
        %v713 = vpop.f32.mrf.mxu0
        %v714 = vadd.f32 %v585, %v713
        %v715 = vpop.f32.mrf.mxu0
        %716 = vmatprep.mubr.f32.mxu0 0.0
        %717 = vmatmul.mubr.f32.gmra.mxu0 %v625
        %v718 = vpop.f32.mrf.mxu0
        %v719 = vadd.f32 %v590, %v718
        %v720 = vpop.f32.mrf.mxu0
        %721 = vmatprep.mubr.f32.mxu0 0.0
        %722 = vmatmul.mubr.f32.gmra.mxu0 %v628
        %v723 = vpop.f32.mrf.mxu0
        %v724 = vadd.f32 %v595, %v723
        %v725 = vpop.f32.mrf.mxu0
        %726 = vmatprep.mubr.f32.mxu0 0.0
        %727 = vmatmul.mubr.f32.gmra.mxu0 %v631
        %v728 = vpop.f32.mrf.mxu0
        %v729 = vadd.f32 %v600, %v728
        %v730 = vpop.f32.mrf.mxu0
        %731 = vmatprep.mubr.f32.mxu0 0.0
        %732 = vmatmul.mubr.f32.gmra.mxu0 %v634
        %v733 = vpop.f32.mrf.mxu0
        %v734 = vadd.f32 %v605, %v733
        %v735 = vpop.f32.mrf.mxu0
        %736 = vmatprep.mubr.f32.mxu0 0.0
        %737 = vmatmul.mubr.f32.gmra.mxu0 %v637
        %v738 = vpop.f32.mrf.mxu0
        %v739 = vadd.f32 %v610, %v738
        %v740 = vpop.f32.mrf.mxu0
        %741 = vmatprep.mubr.f32.mxu0 0.0
        %742 = vmatmul.mubr.f32.gmra.mxu0 %v640
        %v743 = vpop.f32.mrf.mxu0
        %v744 = vadd.f32 %v615, %v743
        %v745 = vpop.f32.mrf.mxu0
        %746 = vdwg.mxu0
        %v747 = vld [vmem:[%s3] sm:$0xff]
        %v748 = vld [vmem:[%s3 + $0x8] sm:$0xff]
        %v749 = vld [vmem:[%s3 + $0x10] sm:$0xff]
        %v750 = vld [vmem:[%s3 + $0x18] sm:$0xff]
        %v751 = vld [vmem:[%s3 + $0x20] sm:$0xff]
        %v752 = vld [vmem:[%s3 + $0x28] sm:$0xff]
        %v753 = vld [vmem:[%s3 + $0x30] sm:$0xff]
        %v754 = vld [vmem:[%s3 + $0x38] sm:$0xff]
        %v755 = vand.u32 2147483647, %v367
        %vm756 = vcmp.le.f32.partialorder %v755, 0.7853982
        %vm757 = vcmp.lt.s32.totalorder %v367, 0
        %v758 = vand.u32 %v367, 2139095040
        %v759 = vshrl.u32 %v758, 23
        %v760 = vsub.s32 %v759, 127
        %v761 = vand.u32 2147483647, %v367
        %v762 = vand.u32 %v761, 8388607
        %v763 = vor.u32 %v762, 8388608
        %v764 = vsub.s32 0, %v763
        %v765 = vadd.s32 %v760, 1
        %vm766 = vcmp.gt.s32.totalorder %v765, 0
        %v767 = vsel %vm766, %v765, 0
        %v768 = vshrl.u32 %v767, 5
        %v769 = vand.u32 %v767, 31
        %v770 = vsub.s32 32, %v769
        %v771 = vshrl.u32 683565275, %v770
        %v772 = vshll.u32 683565275, %v769
        %v773 = vshrl.u32 2475754826, %v770
        %v774 = vor.u32 %v772, %v773
        %v775 = vshll.u32 2475754826, %v769
        %v776 = vshrl.u32 2131351028, %v770
        %v777 = vor.u32 %v775, %v776
        %v778 = vshll.u32 2131351028, %v769
        %v779 = vshrl.u32 2102212464, %v770
        %v780 = vor.u32 %v778, %v779
        %v781 = vshll.u32 2102212464, %v769
        %v782 = vshrl.u32 920167782, %v770
        %v783 = vor.u32 %v781, %v782
        %v784 = vshll.u32 920167782, %v769
        %v785 = vshrl.u32 1326507024, %v770
        %v786 = vor.u32 %v784, %v785
        %vm787 = vcmp.lt.s32.totalorder %v768, 1
        %vm788 = vcmp.lt.s32.totalorder %v768, 2
        %vm789 = vcmp.lt.s32.totalorder %v768, 3
        %vm790 = vcmp.lt.s32.totalorder %v768, 4
        %v791 = vsel %vm787, %v771, %v774
        %v792 = vsel %vm790, %v780, 2102212464
        %v793 = vsel %vm789, %v777, %v792
        %v794 = vsel %vm788, %v791, %v793
        %v795 = vsel %vm787, %v774, %v777
        %v796 = vsel %vm790, %v783, 920167782
        %v797 = vsel %vm789, %v780, %v796
        %v798 = vsel %vm788, %v795, %v797
        %v799 = vsel %vm787, %v777, %v780
        %v800 = vsel %vm790, %v786, 1326507024
        %v801 = vsel %vm789, %v783, %v800
        %v802 = vsel %vm788, %v799, %v801
        %v803 = vshll.u32 %v763, 8
        %v804 = vmul.u32.u64.compose %v803, %v802
        %v805 = vextract.low.u32 %v804
        %v806 = vextract.high.u32 %v804
        %v807 = vmul.u32.u64.compose %v803, %v798
        %v808 = vextract.low.u32 %v807
        %v809 = vextract.high.u32 %v807
        %v810 = vmul.u32 %v803, %v794
        %v811 = vadd.s32 %v806, %v808
        %vm812 = vc.u32 %v806, %v808
        %v813 = vadd.s32 %v809, 1
        %v814 = vsel %vm812, %v813, %v809
        %v815 = vadd.s32 %v810, %v814
        %v816 = vadd.s32 %v815, 536870912
        %v817 = vshrl.u32 %v816, 30
        %v818 = vshll.u32 %v817, 30
        %v819 = vsub.s32 %v815, %v818
        %vm820 = vcmp.lt.s32.totalorder %v819, 0
        %v821 = vsub.s32 0, %v819
        %v822 = vsel %vm820, %v821, %v819
        %v823 = vclz %v822
        %v824 = vsub.s32 %v823, 2
        %vm825 = vcmp.gt.s32.totalorder 0, %v824
        %v826 = vsel %vm825, 0, %v824
        %v827 = vsub.s32 32, %v826
        %v828 = vshll.u32 %v819, %v826
        %v829 = vshrl.u32 %v811, %v827
        %v830 = vor.u32 %v828, %v829
        %v831 = vsub.s32 4294967266, %v826
        %v832 = vadd.s32 %v831, 127
        %v833 = vshll.u32 %v832, 23
        %v834 = vor.u32 4788187, %v833
        %v835 = vand.u32 2147483647, %v834
        %v837 = vcvt.s32.f32 %v830
        %v838 = vmul.f32 %v837, %v835
        %v839 = vxor.u32 %v838, 2147483648
        %v840 = vsel %vm757, %v839, %v838
        %v841 = vsub.s32 4, %v817
        %v842 = vsel %vm757, %v841, %v817
        %v843 = vsel %vm756, %v367, %v840
        %v844 = vsel %vm756, 0, %v842
        %v845 = vcosq.f32.pop %v843
        %v846 = vsinq.f32.pop %v843
        %vm847 = vweird.f32 %v367
        %v848 = vadd.s32 %v844, 3
        %v849 = vand.u32 %v848, 3
        %vm850 = vcmp.lt.s32.totalorder %v849, 2
        %vm851 = vcmp.eq.s32.totalorder %v849, 0
        %v852 = vxor.u32 %v846, 2147483648
        %v853 = vsel %vm851, %v845, %v852
        %vm854 = vcmp.eq.s32.totalorder %v849, 2
        %v855 = vxor.u32 %v845, 2147483648
        %v856 = vsel %vm854, %v855, %v846
        %v857 = vsel %vm850, %v853, %v856
        %v858 = vsel %vm847, nan, %v857
        %v860 = vsel %vm488, %v747, 0
        %v863 = vsel %vm488, %v748, 0
        %v866 = vsel %vm488, %v749, 0
        %v869 = vsel %vm488, %v750, 0
        %v872 = vsel %vm488, %v751, 0
        %v875 = vsel %vm488, %v752, 0
        %v878 = vsel %vm488, %v753, 0
        %v881 = vsel %vm488, %v754, 0
        %883 = vmatprep.subr.mxu0 0.0
        %884 = vmatpush1.msra.mxu0 0.0
        %885 = vmatprep.subr.mxu0 0.0
        %886 = vmatpush1.msra.mxu0 0.0
        %887 = vmatprep.subr.mxu0 0.0
        %888 = vmatpush1.msra.mxu0 0.0
        %889 = vmatprep.subr.mxu0 0.0
        %890 = vmatpush1.msra.mxu0 0.0
        %891 = vmatprep.subr.mxu0 0.0
        %892 = vmatpush1.msra.mxu0 0.0
        %893 = vmatprep.subr.mxu0 0.0
        %894 = vmatpush1.msra.mxu0 0.0
        %895 = vmatprep.subr.mxu0 0.0
        %896 = vmatpush1.msra.mxu0 0.0
        %897 = vmatprep.subr.mxu0 0.0
        %898 = vmatpush1.msra.mxu0 0.0
        %899 = vmatprep.subr.mxu0 0.0
        %900 = vmatpush1.msra.mxu0 0.0
        %901 = vmatprep.subr.mxu0 0.0
        %902 = vmatpush1.msra.mxu0 0.0
        %903 = vmatprep.subr.mxu0 0.0
        %904 = vmatpush1.msra.mxu0 0.0
        %905 = vmatprep.subr.mxu0 0.0
        %906 = vmatpush1.msra.mxu0 0.0
        %907 = vmatprep.subr.mxu0 0.0
        %908 = vmatpush1.msra.mxu0 0.0
        %909 = vmatprep.subr.mxu0 0.0
        %910 = vmatpush1.msra.mxu0 0.0
        %911 = vmatprep.subr.mxu0 0.0
        %912 = vmatpush1.msra.mxu0 0.0
        %913 = vmatprep.subr.mxu0 0.0
        %914 = vmatpush1.msra.mxu0 %v858
        %915 = vmatprep.subr.mxu0 0.0
        %916 = vmatpush2.msra.mxu0 0.0
        %917 = vmatprep.subr.mxu0 0.0
        %918 = vmatpush2.msra.mxu0 0.0
        %919 = vmatprep.subr.mxu0 0.0
        %920 = vmatpush2.msra.mxu0 0.0
        %921 = vmatprep.subr.mxu0 0.0
        %922 = vmatpush2.msra.mxu0 0.0
        %923 = vmatprep.subr.mxu0 0.0
        %924 = vmatpush2.msra.mxu0 0.0
        %925 = vmatprep.subr.mxu0 0.0
        %926 = vmatpush2.msra.mxu0 0.0
        %927 = vmatprep.subr.mxu0 0.0
        %928 = vmatpush2.msra.mxu0 0.0
        %929 = vmatprep.subr.mxu0 0.0
        %930 = vmatpush2.msra.mxu0 0.0
        %931 = vmatprep.subr.mxu0 0.0
        %932 = vmatpush2.msra.mxu0 0.0
        %933 = vmatprep.subr.mxu0 0.0
        %934 = vmatpush2.msra.mxu0 0.0
        %935 = vmatprep.subr.mxu0 0.0
        %936 = vmatpush2.msra.mxu0 0.0
        %937 = vmatprep.subr.mxu0 0.0
        %938 = vmatpush2.msra.mxu0 0.0
        %939 = vmatprep.subr.mxu0 0.0
        %940 = vmatpush2.msra.mxu0 0.0
        %941 = vmatprep.subr.mxu0 0.0
        %942 = vmatpush2.msra.mxu0 0.0
        %943 = vmatprep.subr.mxu0 0.0
        %944 = vmatpush2.msra.mxu0 0.0
        %945 = vmatprep.subr.mxu0 0.0
        %946 = vmatpush2.msra.mxu0 0.0
        %947 = vmatprep.mubr.f32.mxu0 0.0
        %948 = vmatmul.mubr.f32.gmra.mxu0 %v860
        %v949 = vpop.f32.mrf.mxu0
        %v950 = vadd.f32 0.0, %v949
        %v951 = vpop.f32.mrf.mxu0
        %952 = vmatprep.mubr.f32.mxu0 0.0
        %953 = vmatmul.mubr.f32.gmra.mxu0 %v863
        %v954 = vpop.f32.mrf.mxu0
        %v955 = vadd.f32 0.0, %v954
        %v956 = vpop.f32.mrf.mxu0
        %957 = vmatprep.mubr.f32.mxu0 0.0
        %958 = vmatmul.mubr.f32.gmra.mxu0 %v866
        %v959 = vpop.f32.mrf.mxu0
        %v960 = vadd.f32 0.0, %v959
        %v961 = vpop.f32.mrf.mxu0
        %962 = vmatprep.mubr.f32.mxu0 0.0
        %963 = vmatmul.mubr.f32.gmra.mxu0 %v869
        %v964 = vpop.f32.mrf.mxu0
        %v965 = vadd.f32 0.0, %v964
        %v966 = vpop.f32.mrf.mxu0
        %967 = vmatprep.mubr.f32.mxu0 0.0
        %968 = vmatmul.mubr.f32.gmra.mxu0 %v872
        %v969 = vpop.f32.mrf.mxu0
        %v970 = vadd.f32 0.0, %v969
        %v971 = vpop.f32.mrf.mxu0
        %972 = vmatprep.mubr.f32.mxu0 0.0
        %973 = vmatmul.mubr.f32.gmra.mxu0 %v875
        %v974 = vpop.f32.mrf.mxu0
        %v975 = vadd.f32 0.0, %v974
        %v976 = vpop.f32.mrf.mxu0
        %977 = vmatprep.mubr.f32.mxu0 0.0
        %978 = vmatmul.mubr.f32.gmra.mxu0 %v878
        %v979 = vpop.f32.mrf.mxu0
        %v980 = vadd.f32 0.0, %v979
        %v981 = vpop.f32.mrf.mxu0
        %982 = vmatprep.mubr.f32.mxu0 0.0
        %983 = vmatmul.mubr.f32.gmra.mxu0 %v881
        %v984 = vpop.f32.mrf.mxu0
        %v985 = vadd.f32 0.0, %v984
        %v986 = vpop.f32.mrf.mxu0
        %987 = vdwg.mxu0
        %v988 = vadd.f32 %v709, %v950
        %v989 = vadd.f32 %v714, %v955
        %v990 = vadd.f32 %v719, %v960
        %v991 = vadd.f32 %v724, %v965
        %v992 = vadd.f32 %v729, %v970
        %v993 = vadd.f32 %v734, %v975
        %v994 = vadd.f32 %v739, %v980
        %v995 = vadd.f32 %v744, %v985
        %v996 = vld [vmem:[%s4] sm:$0xff]
        %v997 = vld [vmem:[%s4 + $0x8] sm:$0xff]
        %v998 = vld [vmem:[%s4 + $0x10] sm:$0xff]
        %v999 = vld [vmem:[%s4 + $0x18] sm:$0xff]
        %v1000 = vld [vmem:[%s4 + $0x20] sm:$0xff]
        %v1001 = vld [vmem:[%s4 + $0x28] sm:$0xff]
        %v1002 = vld [vmem:[%s4 + $0x30] sm:$0xff]
        %v1003 = vld [vmem:[%s4 + $0x38] sm:$0xff]
        %v1004 = vand.u32 2147483647, %v366
        %vm1005 = vcmp.le.f32.partialorder %v1004, 0.7853982
        %vm1006 = vcmp.lt.s32.totalorder %v366, 0
        %v1007 = vand.u32 %v366, 2139095040
        %v1008 = vshrl.u32 %v1007, 23
        %v1009 = vsub.s32 %v1008, 127
        %v1010 = vand.u32 2147483647, %v366
        %v1011 = vand.u32 %v1010, 8388607
        %v1012 = vor.u32 %v1011, 8388608
        %v1013 = vsub.s32 0, %v1012
        %v1014 = vadd.s32 %v1009, 1
        %vm1015 = vcmp.gt.s32.totalorder %v1014, 0
        %v1016 = vsel %vm1015, %v1014, 0
        %v1017 = vshrl.u32 %v1016, 5
        %v1018 = vand.u32 %v1016, 31
        %v1019 = vsub.s32 32, %v1018
        %v1020 = vshrl.u32 683565275, %v1019
        %v1021 = vshll.u32 683565275, %v1018
        %v1022 = vshrl.u32 2475754826, %v1019
        %v1023 = vor.u32 %v1021, %v1022
        %v1024 = vshll.u32 2475754826, %v1018
        %v1025 = vshrl.u32 2131351028, %v1019
        %v1026 = vor.u32 %v1024, %v1025
        %v1027 = vshll.u32 2131351028, %v1018
        %v1028 = vshrl.u32 2102212464, %v1019
        %v1029 = vor.u32 %v1027, %v1028
        %v1030 = vshll.u32 2102212464, %v1018
        %v1031 = vshrl.u32 920167782, %v1019
        %v1032 = vor.u32 %v1030, %v1031
        %v1033 = vshll.u32 920167782, %v1018
        %v1034 = vshrl.u32 1326507024, %v1019
        %v1035 = vor.u32 %v1033, %v1034
        %vm1036 = vcmp.lt.s32.totalorder %v1017, 1
        %vm1037 = vcmp.lt.s32.totalorder %v1017, 2
        %vm1038 = vcmp.lt.s32.totalorder %v1017, 3
        %vm1039 = vcmp.lt.s32.totalorder %v1017, 4
        %v1040 = vsel %vm1036, %v1020, %v1023
        %v1041 = vsel %vm1039, %v1029, 2102212464
        %v1042 = vsel %vm1038, %v1026, %v1041
        %v1043 = vsel %vm1037, %v1040, %v1042
        %v1044 = vsel %vm1036, %v1023, %v1026
        %v1045 = vsel %vm1039, %v1032, 920167782
        %v1046 = vsel %vm1038, %v1029, %v1045
        %v1047 = vsel %vm1037, %v1044, %v1046
        %v1048 = vsel %vm1036, %v1026, %v1029
        %v1049 = vsel %vm1039, %v1035, 1326507024
        %v1050 = vsel %vm1038, %v1032, %v1049
        %v1051 = vsel %vm1037, %v1048, %v1050
        %v1052 = vshll.u32 %v1012, 8
        %v1053 = vmul.u32.u64.compose %v1052, %v1051
        %v1054 = vextract.low.u32 %v1053
        %v1055 = vextract.high.u32 %v1053
        %v1056 = vmul.u32.u64.compose %v1052, %v1047
        %v1057 = vextract.low.u32 %v1056
        %v1058 = vextract.high.u32 %v1056
        %v1059 = vmul.u32 %v1052, %v1043
        %v1060 = vadd.s32 %v1055, %v1057
        %vm1061 = vc.u32 %v1055, %v1057
        %v1062 = vadd.s32 %v1058, 1
        %v1063 = vsel %vm1061, %v1062, %v1058
        %v1064 = vadd.s32 %v1059, %v1063
        %v1065 = vadd.s32 %v1064, 536870912
        %v1066 = vshrl.u32 %v1065, 30
        %v1067 = vshll.u32 %v1066, 30
        %v1068 = vsub.s32 %v1064, %v1067
        %vm1069 = vcmp.lt.s32.totalorder %v1068, 0
        %v1070 = vsub.s32 0, %v1068
        %v1071 = vsel %vm1069, %v1070, %v1068
        %v1072 = vclz %v1071
        %v1073 = vsub.s32 %v1072, 2
        %vm1074 = vcmp.gt.s32.totalorder 0, %v1073
        %v1075 = vsel %vm1074, 0, %v1073
        %v1076 = vsub.s32 32, %v1075
        %v1077 = vshll.u32 %v1068, %v1075
        %v1078 = vshrl.u32 %v1060, %v1076
        %v1079 = vor.u32 %v1077, %v1078
        %v1080 = vsub.s32 4294967266, %v1075
        %v1081 = vadd.s32 %v1080, 127
        %v1082 = vshll.u32 %v1081, 23
        %v1083 = vor.u32 4788187, %v1082
        %v1084 = vand.u32 2147483647, %v1083
        %v1086 = vcvt.s32.f32 %v1079
        %v1087 = vmul.f32 %v1086, %v1084
        %v1088 = vxor.u32 %v1087, 2147483648
        %v1089 = vsel %vm1006, %v1088, %v1087
        %v1090 = vsub.s32 4, %v1066
        %v1091 = vsel %vm1006, %v1090, %v1066
        %v1092 = vsel %vm1005, %v366, %v1089
        %v1093 = vsel %vm1005, 0, %v1091
        %v1094 = vcosq.f32.pop %v1092
        %v1095 = vsinq.f32.pop %v1092
        %vm1096 = vweird.f32 %v366
        %v1097 = vand.u32 %v1093, 3
        %vm1098 = vcmp.lt.s32.totalorder %v1097, 2
        %vm1099 = vcmp.eq.s32.totalorder %v1097, 0
        %v1100 = vxor.u32 %v1095, 2147483648
        %v1101 = vsel %vm1099, %v1094, %v1100
        %vm1102 = vcmp.eq.s32.totalorder %v1097, 2
        %v1103 = vxor.u32 %v1094, 2147483648
        %v1104 = vsel %vm1102, %v1103, %v1095
        %v1105 = vsel %vm1098, %v1101, %v1104
        %v1106 = vsel %vm1096, nan, %v1105
        %v1108 = vsel %vm488, %v996, 0
        %v1111 = vsel %vm488, %v997, 0
        %v1114 = vsel %vm488, %v998, 0
        %v1117 = vsel %vm488, %v999, 0
        %v1120 = vsel %vm488, %v1000, 0
        %v1123 = vsel %vm488, %v1001, 0
        %v1126 = vsel %vm488, %v1002, 0
        %v1129 = vsel %vm488, %v1003, 0
        %1131 = vmatprep.subr.mxu0 0.0
        %1132 = vmatpush1.msra.mxu0 0.0
        %1133 = vmatprep.subr.mxu0 0.0
        %1134 = vmatpush1.msra.mxu0 0.0
        %1135 = vmatprep.subr.mxu0 0.0
        %1136 = vmatpush1.msra.mxu0 0.0
        %1137 = vmatprep.subr.mxu0 0.0
        %1138 = vmatpush1.msra.mxu0 0.0
        %1139 = vmatprep.subr.mxu0 0.0
        %1140 = vmatpush1.msra.mxu0 0.0
        %1141 = vmatprep.subr.mxu0 0.0
        %1142 = vmatpush1.msra.mxu0 0.0
        %1143 = vmatprep.subr.mxu0 0.0
        %1144 = vmatpush1.msra.mxu0 0.0
        %1145 = vmatprep.subr.mxu0 0.0
        %1146 = vmatpush1.msra.mxu0 0.0
        %1147 = vmatprep.subr.mxu0 0.0
        %1148 = vmatpush1.msra.mxu0 0.0
        %1149 = vmatprep.subr.mxu0 0.0
        %1150 = vmatpush1.msra.mxu0 0.0
        %1151 = vmatprep.subr.mxu0 0.0
        %1152 = vmatpush1.msra.mxu0 0.0
        %1153 = vmatprep.subr.mxu0 0.0
        %1154 = vmatpush1.msra.mxu0 0.0
        %1155 = vmatprep.subr.mxu0 0.0
        %1156 = vmatpush1.msra.mxu0 0.0
        %1157 = vmatprep.subr.mxu0 0.0
        %1158 = vmatpush1.msra.mxu0 0.0
        %1159 = vmatprep.subr.mxu0 0.0
        %1160 = vmatpush1.msra.mxu0 0.0
        %1161 = vmatprep.subr.mxu0 0.0
        %1162 = vmatpush1.msra.mxu0 %v1106
        %1163 = vmatprep.subr.mxu0 0.0
        %1164 = vmatpush2.msra.mxu0 0.0
        %1165 = vmatprep.subr.mxu0 0.0
        %1166 = vmatpush2.msra.mxu0 0.0
        %1167 = vmatprep.subr.mxu0 0.0
        %1168 = vmatpush2.msra.mxu0 0.0
        %1169 = vmatprep.subr.mxu0 0.0
        %1170 = vmatpush2.msra.mxu0 0.0
        %1171 = vmatprep.subr.mxu0 0.0
        %1172 = vmatpush2.msra.mxu0 0.0
        %1173 = vmatprep.subr.mxu0 0.0
        %1174 = vmatpush2.msra.mxu0 0.0
        %1175 = vmatprep.subr.mxu0 0.0
        %1176 = vmatpush2.msra.mxu0 0.0
        %1177 = vmatprep.subr.mxu0 0.0
        %1178 = vmatpush2.msra.mxu0 0.0
        %1179 = vmatprep.subr.mxu0 0.0
        %1180 = vmatpush2.msra.mxu0 0.0
        %1181 = vmatprep.subr.mxu0 0.0
        %1182 = vmatpush2.msra.mxu0 0.0
        %1183 = vmatprep.subr.mxu0 0.0
        %1184 = vmatpush2.msra.mxu0 0.0
        %1185 = vmatprep.subr.mxu0 0.0
        %1186 = vmatpush2.msra.mxu0 0.0
        %1187 = vmatprep.subr.mxu0 0.0
        %1188 = vmatpush2.msra.mxu0 0.0
        %1189 = vmatprep.subr.mxu0 0.0
        %1190 = vmatpush2.msra.mxu0 0.0
        %1191 = vmatprep.subr.mxu0 0.0
        %1192 = vmatpush2.msra.mxu0 0.0
        %1193 = vmatprep.subr.mxu0 0.0
        %1194 = vmatpush2.msra.mxu0 0.0
        %1195 = vmatprep.mubr.f32.mxu0 0.0
        %1196 = vmatmul.mubr.f32.gmra.mxu0 %v1108
        %v1197 = vpop.f32.mrf.mxu0
        %v1198 = vadd.f32 0.0, %v1197
        %v1199 = vpop.f32.mrf.mxu0
        %1200 = vmatprep.mubr.f32.mxu0 0.0
        %1201 = vmatmul.mubr.f32.gmra.mxu0 %v1111
        %v1202 = vpop.f32.mrf.mxu0
        %v1203 = vadd.f32 0.0, %v1202
        %v1204 = vpop.f32.mrf.mxu0
        %1205 = vmatprep.mubr.f32.mxu0 0.0
        %1206 = vmatmul.mubr.f32.gmra.mxu0 %v1114
        %v1207 = vpop.f32.mrf.mxu0
        %v1208 = vadd.f32 0.0, %v1207
        %v1209 = vpop.f32.mrf.mxu0
        %1210 = vmatprep.mubr.f32.mxu0 0.0
        %1211 = vmatmul.mubr.f32.gmra.mxu0 %v1117
        %v1212 = vpop.f32.mrf.mxu0
        %v1213 = vadd.f32 0.0, %v1212
        %v1214 = vpop.f32.mrf.mxu0
        %1215 = vmatprep.mubr.f32.mxu0 0.0
        %1216 = vmatmul.mubr.f32.gmra.mxu0 %v1120
        %v1217 = vpop.f32.mrf.mxu0
        %v1218 = vadd.f32 0.0, %v1217
        %v1219 = vpop.f32.mrf.mxu0
        %1220 = vmatprep.mubr.f32.mxu0 0.0
        %1221 = vmatmul.mubr.f32.gmra.mxu0 %v1123
        %v1222 = vpop.f32.mrf.mxu0
        %v1223 = vadd.f32 0.0, %v1222
        %v1224 = vpop.f32.mrf.mxu0
        %1225 = vmatprep.mubr.f32.mxu0 0.0
        %1226 = vmatmul.mubr.f32.gmra.mxu0 %v1126
        %v1227 = vpop.f32.mrf.mxu0
        %v1228 = vadd.f32 0.0, %v1227
        %v1229 = vpop.f32.mrf.mxu0
        %1230 = vmatprep.mubr.f32.mxu0 0.0
        %1231 = vmatmul.mubr.f32.gmra.mxu0 %v1129
        %v1232 = vpop.f32.mrf.mxu0
        %v1233 = vadd.f32 0.0, %v1232
        %v1234 = vpop.f32.mrf.mxu0
        %1235 = vdwg.mxu0
        %v1236 = vadd.f32 %v988, %v1198
        %v1237 = vadd.f32 %v989, %v1203
        %v1238 = vadd.f32 %v990, %v1208
        %v1239 = vadd.f32 %v991, %v1213
        %v1240 = vadd.f32 %v992, %v1218
        %v1241 = vadd.f32 %v993, %v1223
        %v1242 = vadd.f32 %v994, %v1228
        %v1243 = vadd.f32 %v995, %v1233
        %v1244 = vld [vmem:[%s5] sm:$0xff]
        %v1245 = vld [vmem:[%s5 + $0x8] sm:$0xff]
        %v1246 = vld [vmem:[%s5 + $0x10] sm:$0xff]
        %v1247 = vld [vmem:[%s5 + $0x18] sm:$0xff]
        %v1248 = vld [vmem:[%s5 + $0x20] sm:$0xff]
        %v1249 = vld [vmem:[%s5 + $0x28] sm:$0xff]
        %v1250 = vld [vmem:[%s5 + $0x30] sm:$0xff]
        %v1251 = vld [vmem:[%s5 + $0x38] sm:$0xff]
        %v1252 = vand.u32 2147483647, %v367
        %vm1253 = vcmp.le.f32.partialorder %v1252, 0.7853982
        %vm1254 = vcmp.lt.s32.totalorder %v367, 0
        %v1255 = vand.u32 %v367, 2139095040
        %v1256 = vshrl.u32 %v1255, 23
        %v1257 = vsub.s32 %v1256, 127
        %v1258 = vand.u32 2147483647, %v367
        %v1259 = vand.u32 %v1258, 8388607
        %v1260 = vor.u32 %v1259, 8388608
        %v1261 = vsub.s32 0, %v1260
        %v1262 = vadd.s32 %v1257, 1
        %vm1263 = vcmp.gt.s32.totalorder %v1262, 0
        %v1264 = vsel %vm1263, %v1262, 0
        %v1265 = vshrl.u32 %v1264, 5
        %v1266 = vand.u32 %v1264, 31
        %v1267 = vsub.s32 32, %v1266
        %v1268 = vshrl.u32 683565275, %v1267
        %v1269 = vshll.u32 683565275, %v1266
        %v1270 = vshrl.u32 2475754826, %v1267
        %v1271 = vor.u32 %v1269, %v1270
        %v1272 = vshll.u32 2475754826, %v1266
        %v1273 = vshrl.u32 2131351028, %v1267
        %v1274 = vor.u32 %v1272, %v1273
        %v1275 = vshll.u32 2131351028, %v1266
        %v1276 = vshrl.u32 2102212464, %v1267
        %v1277 = vor.u32 %v1275, %v1276
        %v1278 = vshll.u32 2102212464, %v1266
        %v1279 = vshrl.u32 920167782, %v1267
        %v1280 = vor.u32 %v1278, %v1279
        %v1281 = vshll.u32 920167782, %v1266
        %v1282 = vshrl.u32 1326507024, %v1267
        %v1283 = vor.u32 %v1281, %v1282
        %vm1284 = vcmp.lt.s32.totalorder %v1265, 1
        %vm1285 = vcmp.lt.s32.totalorder %v1265, 2
        %vm1286 = vcmp.lt.s32.totalorder %v1265, 3
        %vm1287 = vcmp.lt.s32.totalorder %v1265, 4
        %v1288 = vsel %vm1284, %v1268, %v1271
        %v1289 = vsel %vm1287, %v1277, 2102212464
        %v1290 = vsel %vm1286, %v1274, %v1289
        %v1291 = vsel %vm1285, %v1288, %v1290
        %v1292 = vsel %vm1284, %v1271, %v1274
        %v1293 = vsel %vm1287, %v1280, 920167782
        %v1294 = vsel %vm1286, %v1277, %v1293
        %v1295 = vsel %vm1285, %v1292, %v1294
        %v1296 = vsel %vm1284, %v1274, %v1277
        %v1297 = vsel %vm1287, %v1283, 1326507024
        %v1298 = vsel %vm1286, %v1280, %v1297
        %v1299 = vsel %vm1285, %v1296, %v1298
        %v1300 = vshll.u32 %v1260, 8
        %v1301 = vmul.u32.u64.compose %v1300, %v1299
        %v1302 = vextract.low.u32 %v1301
        %v1303 = vextract.high.u32 %v1301
        %v1304 = vmul.u32.u64.compose %v1300, %v1295
        %v1305 = vextract.low.u32 %v1304
        %v1306 = vextract.high.u32 %v1304
        %v1307 = vmul.u32 %v1300, %v1291
        %v1308 = vadd.s32 %v1303, %v1305
        %vm1309 = vc.u32 %v1303, %v1305
        %v1310 = vadd.s32 %v1306, 1
        %v1311 = vsel %vm1309, %v1310, %v1306
        %v1312 = vadd.s32 %v1307, %v1311
        %v1313 = vadd.s32 %v1312, 536870912
        %v1314 = vshrl.u32 %v1313, 30
        %v1315 = vshll.u32 %v1314, 30
        %v1316 = vsub.s32 %v1312, %v1315
        %vm1317 = vcmp.lt.s32.totalorder %v1316, 0
        %v1318 = vsub.s32 0, %v1316
        %v1319 = vsel %vm1317, %v1318, %v1316
        %v1320 = vclz %v1319
        %v1321 = vsub.s32 %v1320, 2
        %vm1322 = vcmp.gt.s32.totalorder 0, %v1321
        %v1323 = vsel %vm1322, 0, %v1321
        %v1324 = vsub.s32 32, %v1323
        %v1325 = vshll.u32 %v1316, %v1323
        %v1326 = vshrl.u32 %v1308, %v1324
        %v1327 = vor.u32 %v1325, %v1326
        %v1328 = vsub.s32 4294967266, %v1323
        %v1329 = vadd.s32 %v1328, 127
        %v1330 = vshll.u32 %v1329, 23
        %v1331 = vor.u32 4788187, %v1330
        %v1332 = vand.u32 2147483647, %v1331
        %v1334 = vcvt.s32.f32 %v1327
        %v1335 = vmul.f32 %v1334, %v1332
        %v1336 = vxor.u32 %v1335, 2147483648
        %v1337 = vsel %vm1254, %v1336, %v1335
        %v1338 = vsub.s32 4, %v1314
        %v1339 = vsel %vm1254, %v1338, %v1314
        %v1340 = vsel %vm1253, %v367, %v1337
        %v1341 = vsel %vm1253, 0, %v1339
        %v1342 = vcosq.f32.pop %v1340
        %v1343 = vsinq.f32.pop %v1340
        %vm1344 = vweird.f32 %v367
        %v1345 = vand.u32 %v1341, 3
        %vm1346 = vcmp.lt.s32.totalorder %v1345, 2
        %vm1347 = vcmp.eq.s32.totalorder %v1345, 0
        %v1348 = vxor.u32 %v1343, 2147483648
        %v1349 = vsel %vm1347, %v1342, %v1348
        %vm1350 = vcmp.eq.s32.totalorder %v1345, 2
        %v1351 = vxor.u32 %v1342, 2147483648
        %v1352 = vsel %vm1350, %v1351, %v1343
        %v1353 = vsel %vm1346, %v1349, %v1352
        %v1354 = vsel %vm1344, nan, %v1353
        %v1356 = vsel %vm488, %v1244, 0
        %v1359 = vsel %vm488, %v1245, 0
        %v1362 = vsel %vm488, %v1246, 0
        %v1365 = vsel %vm488, %v1247, 0
        %v1368 = vsel %vm488, %v1248, 0
        %v1371 = vsel %vm488, %v1249, 0
        %v1374 = vsel %vm488, %v1250, 0
        %v1377 = vsel %vm488, %v1251, 0
        %1379 = vmatprep.subr.mxu0 0.0
        %1380 = vmatpush1.msra.mxu0 0.0
        %1381 = vmatprep.subr.mxu0 0.0
        %1382 = vmatpush1.msra.mxu0 0.0
        %1383 = vmatprep.subr.mxu0 0.0
        %1384 = vmatpush1.msra.mxu0 0.0
        %1385 = vmatprep.subr.mxu0 0.0
        %1386 = vmatpush1.msra.mxu0 0.0
        %1387 = vmatprep.subr.mxu0 0.0
        %1388 = vmatpush1.msra.mxu0 0.0
        %1389 = vmatprep.subr.mxu0 0.0
        %1390 = vmatpush1.msra.mxu0 0.0
        %1391 = vmatprep.subr.mxu0 0.0
        %1392 = vmatpush1.msra.mxu0 0.0
        %1393 = vmatprep.subr.mxu0 0.0
        %1394 = vmatpush1.msra.mxu0 0.0
        %1395 = vmatprep.subr.mxu0 0.0
        %1396 = vmatpush1.msra.mxu0 0.0
        %1397 = vmatprep.subr.mxu0 0.0
        %1398 = vmatpush1.msra.mxu0 0.0
        %1399 = vmatprep.subr.mxu0 0.0
        %1400 = vmatpush1.msra.mxu0 0.0
        %1401 = vmatprep.subr.mxu0 0.0
        %1402 = vmatpush1.msra.mxu0 0.0
        %1403 = vmatprep.subr.mxu0 0.0
        %1404 = vmatpush1.msra.mxu0 0.0
        %1405 = vmatprep.subr.mxu0 0.0
        %1406 = vmatpush1.msra.mxu0 0.0
        %1407 = vmatprep.subr.mxu0 0.0
        %1408 = vmatpush1.msra.mxu0 0.0
        %1409 = vmatprep.subr.mxu0 0.0
        %1410 = vmatpush1.msra.mxu0 %v1354
        %1411 = vmatprep.subr.mxu0 0.0
        %1412 = vmatpush2.msra.mxu0 0.0
        %1413 = vmatprep.subr.mxu0 0.0
        %1414 = vmatpush2.msra.mxu0 0.0
        %1415 = vmatprep.subr.mxu0 0.0
        %1416 = vmatpush2.msra.mxu0 0.0
        %1417 = vmatprep.subr.mxu0 0.0
        %1418 = vmatpush2.msra.mxu0 0.0
        %1419 = vmatprep.subr.mxu0 0.0
        %1420 = vmatpush2.msra.mxu0 0.0
        %1421 = vmatprep.subr.mxu0 0.0
        %1422 = vmatpush2.msra.mxu0 0.0
        %1423 = vmatprep.subr.mxu0 0.0
        %1424 = vmatpush2.msra.mxu0 0.0
        %1425 = vmatprep.subr.mxu0 0.0
        %1426 = vmatpush2.msra.mxu0 0.0
        %1427 = vmatprep.subr.mxu0 0.0
        %1428 = vmatpush2.msra.mxu0 0.0
        %1429 = vmatprep.subr.mxu0 0.0
        %1430 = vmatpush2.msra.mxu0 0.0
        %1431 = vmatprep.subr.mxu0 0.0
        %1432 = vmatpush2.msra.mxu0 0.0
        %1433 = vmatprep.subr.mxu0 0.0
        %1434 = vmatpush2.msra.mxu0 0.0
        %1435 = vmatprep.subr.mxu0 0.0
        %1436 = vmatpush2.msra.mxu0 0.0
        %1437 = vmatprep.subr.mxu0 0.0
        %1438 = vmatpush2.msra.mxu0 0.0
        %1439 = vmatprep.subr.mxu0 0.0
        %1440 = vmatpush2.msra.mxu0 0.0
        %1441 = vmatprep.subr.mxu0 0.0
        %1442 = vmatpush2.msra.mxu0 0.0
        %1443 = vmatprep.mubr.f32.mxu0 0.0
        %1444 = vmatmul.mubr.f32.gmra.mxu0 %v1356
        %v1445 = vpop.f32.mrf.mxu0
        %v1446 = vadd.f32 0.0, %v1445
        %v1447 = vpop.f32.mrf.mxu0
        %1448 = vmatprep.mubr.f32.mxu0 0.0
        %1449 = vmatmul.mubr.f32.gmra.mxu0 %v1359
        %v1450 = vpop.f32.mrf.mxu0
        %v1451 = vadd.f32 0.0, %v1450
        %v1452 = vpop.f32.mrf.mxu0
        %1453 = vmatprep.mubr.f32.mxu0 0.0
        %1454 = vmatmul.mubr.f32.gmra.mxu0 %v1362
        %v1455 = vpop.f32.mrf.mxu0
        %v1456 = vadd.f32 0.0, %v1455
        %v1457 = vpop.f32.mrf.mxu0
        %1458 = vmatprep.mubr.f32.mxu0 0.0
        %1459 = vmatmul.mubr.f32.gmra.mxu0 %v1365
        %v1460 = vpop.f32.mrf.mxu0
        %v1461 = vadd.f32 0.0, %v1460
        %v1462 = vpop.f32.mrf.mxu0
        %1463 = vmatprep.mubr.f32.mxu0 0.0
        %1464 = vmatmul.mubr.f32.gmra.mxu0 %v1368
        %v1465 = vpop.f32.mrf.mxu0
        %v1466 = vadd.f32 0.0, %v1465
        %v1467 = vpop.f32.mrf.mxu0
        %1468 = vmatprep.mubr.f32.mxu0 0.0
        %1469 = vmatmul.mubr.f32.gmra.mxu0 %v1371
        %v1470 = vpop.f32.mrf.mxu0
        %v1471 = vadd.f32 0.0, %v1470
        %v1472 = vpop.f32.mrf.mxu0
        %1473 = vmatprep.mubr.f32.mxu0 0.0
        %1474 = vmatmul.mubr.f32.gmra.mxu0 %v1374
        %v1475 = vpop.f32.mrf.mxu0
        %v1476 = vadd.f32 0.0, %v1475
        %v1477 = vpop.f32.mrf.mxu0
        %1478 = vmatprep.mubr.f32.mxu0 0.0
        %1479 = vmatmul.mubr.f32.gmra.mxu0 %v1377
        %v1480 = vpop.f32.mrf.mxu0
        %v1481 = vadd.f32 0.0, %v1480
        %v1482 = vpop.f32.mrf.mxu0
        %1483 = vdwg.mxu0
        %v1484 = vadd.f32 %v1236, %v1446
        %v1485 = vadd.f32 %v1237, %v1451
        %v1486 = vadd.f32 %v1238, %v1456
        %v1487 = vadd.f32 %v1239, %v1461
        %v1488 = vadd.f32 %v1240, %v1466
        %v1489 = vadd.f32 %v1241, %v1471
        %v1490 = vadd.f32 %v1242, %v1476
        %v1491 = vadd.f32 %v1243, %v1481
        %vm1492 = vcmp.gt.f32.partialorder %v1484, 0.0
        %vm1493 = vcmp.gt.f32.partialorder %v1485, 0.0
        %vm1494 = vcmp.gt.f32.partialorder %v1486, 0.0
        %vm1495 = vcmp.gt.f32.partialorder %v1487, 0.0
        %vm1496 = vcmp.gt.f32.partialorder %v1488, 0.0
        %vm1497 = vcmp.gt.f32.partialorder %v1489, 0.0
        %vm1498 = vcmp.gt.f32.partialorder %v1490, 0.0
        %vm1499 = vcmp.gt.f32.partialorder %v1491, 0.0
        %v1500 = vmin.f32 %v1484, 0.0
        %v1501 = vmin.f32 %v1485, 0.0
        %v1502 = vmin.f32 %v1486, 0.0
        %v1503 = vmin.f32 %v1487, 0.0
        %v1504 = vmin.f32 %v1488, 0.0
        %v1505 = vmin.f32 %v1489, 0.0
        %v1506 = vmin.f32 %v1490, 0.0
        %v1507 = vmin.f32 %v1491, 0.0
        %v1508 = vmul.f32 %v1500, 1.442695
        %v1509 = vpow.pop %v1508
        %v1510 = vmul.f32 %v1501, 1.442695
        %v1511 = vpow.pop %v1510
        %v1512 = vmul.f32 %v1502, 1.442695
        %v1513 = vpow.pop %v1512
        %v1514 = vmul.f32 %v1503, 1.442695
        %v1515 = vpow.pop %v1514
        %v1516 = vmul.f32 %v1504, 1.442695
        %v1517 = vpow.pop %v1516
        %v1518 = vmul.f32 %v1505, 1.442695
        %v1519 = vpow.pop %v1518
        %v1520 = vmul.f32 %v1506, 1.442695
        %v1521 = vpow.pop %v1520
        %v1522 = vmul.f32 %v1507, 1.442695
        %v1523 = vpow.pop %v1522
        %v1524 = vsub.f32 %v1509, 1.0
        %v1525 = vsub.f32 %v1511, 1.0
        %v1526 = vsub.f32 %v1513, 1.0
        %v1527 = vsub.f32 %v1515, 1.0
        %v1528 = vsub.f32 %v1517, 1.0
        %v1529 = vsub.f32 %v1519, 1.0
        %v1530 = vsub.f32 %v1521, 1.0
        %v1531 = vsub.f32 %v1523, 1.0
        %v1532 = vsel %vm1492, %v1484, %v1524
        %v1533 = vsel %vm1493, %v1485, %v1525
        %v1534 = vsel %vm1494, %v1486, %v1526
        %v1535 = vsel %vm1495, %v1487, %v1527
        %v1536 = vsel %vm1496, %v1488, %v1528
        %v1537 = vsel %vm1497, %v1489, %v1529
        %v1538 = vsel %vm1498, %v1490, %v1530
        %v1539 = vsel %vm1499, %v1491, %v1531
        %v1540 = vld [vmem:[%s6] sm:$0xff]
        %v1541 = vld [vmem:[%s6 + $0x8] sm:$0x1f]
        %v1542 = vld [vmem:[%s7] sm:$0xff]
        %v1543 = vld [vmem:[%s7 + $0x8] sm:$0x1f]
        %1545 = vset.pattern.permute.xlu0 0
        %1546 = vperm.xlu0 %1545, %v1542
        %v1547 = vpop.permute.xlu0 %1546
        %1550 = vset.pattern.permute.xlu0 0
        %1551 = vperm.xlu0 %1550, %v1543
        %v1552 = vpop.permute.xlu0 %1551
        %vm1554 = vcmask 523264
        %v1556 = vsel %vm1554, %v1540, 0
        %v1559 = vsel %vm1554, %v1541, 0
        %1561 = vmatprep.subr.mxu0 0.0
        %1562 = vmatpush1.msra.mxu0 0.0
        %1563 = vmatprep.subr.mxu0 0.0
        %1564 = vmatpush1.msra.mxu0 0.0
        %1565 = vmatprep.subr.mxu0 0.0
        %1566 = vmatpush1.msra.mxu0 0.0
        %1567 = vmatprep.subr.mxu0 0.0
        %1568 = vmatpush1.msra.mxu0 0.0
        %1569 = vmatprep.subr.mxu0 0.0
        %1570 = vmatpush1.msra.mxu0 0.0
        %1571 = vmatprep.subr.mxu0 0.0
        %1572 = vmatpush1.msra.mxu0 0.0
        %1573 = vmatprep.subr.mxu0 0.0
        %1574 = vmatpush1.msra.mxu0 0.0
        %1575 = vmatprep.subr.mxu0 0.0
        %1576 = vmatpush1.msra.mxu0 0.0
        %1577 = vmatprep.subr.mxu0 0.0
        %1578 = vmatpush1.msra.mxu0 %v1539
        %1579 = vmatprep.subr.mxu0 0.0
        %1580 = vmatpush1.msra.mxu0 %v1538
        %1581 = vmatprep.subr.mxu0 0.0
        %1582 = vmatpush1.msra.mxu0 %v1537
        %1583 = vmatprep.subr.mxu0 0.0
        %1584 = vmatpush1.msra.mxu0 %v1536
        %1585 = vmatprep.subr.mxu0 0.0
        %1586 = vmatpush1.msra.mxu0 %v1535
        %1587 = vmatprep.subr.mxu0 0.0
        %1588 = vmatpush1.msra.mxu0 %v1534
        %1589 = vmatprep.subr.mxu0 0.0
        %1590 = vmatpush1.msra.mxu0 %v1533
        %1591 = vmatprep.subr.mxu0 0.0
        %1592 = vmatpush1.msra.mxu0 %v1532
        %1593 = vmatprep.subr.mxu0 0.0
        %1594 = vmatpush2.msra.mxu0 0.0
        %1595 = vmatprep.subr.mxu0 0.0
        %1596 = vmatpush2.msra.mxu0 0.0
        %1597 = vmatprep.subr.mxu0 0.0
        %1598 = vmatpush2.msra.mxu0 0.0
        %1599 = vmatprep.subr.mxu0 0.0
        %1600 = vmatpush2.msra.mxu0 0.0
        %1601 = vmatprep.subr.mxu0 0.0
        %1602 = vmatpush2.msra.mxu0 0.0
        %1603 = vmatprep.subr.mxu0 0.0
        %1604 = vmatpush2.msra.mxu0 0.0
        %1605 = vmatprep.subr.mxu0 0.0
        %1606 = vmatpush2.msra.mxu0 0.0
        %1607 = vmatprep.subr.mxu0 0.0
        %1608 = vmatpush2.msra.mxu0 0.0
        %1609 = vmatprep.subr.mxu0 0.0
        %1610 = vmatpush2.msra.mxu0 0.0
        %1611 = vmatprep.subr.mxu0 0.0
        %1612 = vmatpush2.msra.mxu0 0.0
        %1613 = vmatprep.subr.mxu0 0.0
        %1614 = vmatpush2.msra.mxu0 0.0
        %1615 = vmatprep.subr.mxu0 0.0
        %1616 = vmatpush2.msra.mxu0 0.0
        %1617 = vmatprep.subr.mxu0 0.0
        %1618 = vmatpush2.msra.mxu0 0.0
        %1619 = vmatprep.subr.mxu0 0.0
        %1620 = vmatpush2.msra.mxu0 0.0
        %1621 = vmatprep.subr.mxu0 0.0
        %1622 = vmatpush2.msra.mxu0 0.0
        %1623 = vmatprep.subr.mxu0 0.0
        %1624 = vmatpush2.msra.mxu0 0.0
        %1625 = vmatprep.mubr.f32.mxu0 0.0
        %1626 = vmatmul.mubr.f32.gmra.mxu0 %v1556
        %v1627 = vpop.f32.mrf.mxu0
        %v1628 = vadd.f32 %v1547, %v1627
        %v1629 = vpop.f32.mrf.mxu0
        %1630 = vmatprep.mubr.f32.mxu0 0.0
        %1631 = vmatmul.mubr.f32.gmra.mxu0 %v1559
        %v1632 = vpop.f32.mrf.mxu0
        %v1633 = vadd.f32 %v1552, %v1632
        %v1634 = vpop.f32.mrf.mxu0
        %1635 = vdwg.mxu0
        %v1636 = vld [vmem:[%s8] sm:$0xf]
        %v1638 = vsel %vm1554, %v1636, 0
        %1640 = vmatprep.subr.mxu0 0.0
        %1641 = vmatpush1.msra.mxu0 0.0
        %1642 = vmatprep.subr.mxu0 0.0
        %1643 = vmatpush1.msra.mxu0 0.0
        %1644 = vmatprep.subr.mxu0 0.0
        %1645 = vmatpush1.msra.mxu0 0.0
        %1646 = vmatprep.subr.mxu0 0.0
        %1647 = vmatpush1.msra.mxu0 0.0
        %1648 = vmatprep.subr.mxu0 0.0
        %1649 = vmatpush1.msra.mxu0 0.0
        %1650 = vmatprep.subr.mxu0 0.0
        %1651 = vmatpush1.msra.mxu0 0.0
        %1652 = vmatprep.subr.mxu0 0.0
        %1653 = vmatpush1.msra.mxu0 0.0
        %1654 = vmatprep.subr.mxu0 0.0
        %1655 = vmatpush1.msra.mxu0 0.0
        %1656 = vmatprep.subr.mxu0 0.0
        %1657 = vmatpush1.msra.mxu0 %v1539
        %1658 = vmatprep.subr.mxu0 0.0
        %1659 = vmatpush1.msra.mxu0 %v1538
        %1660 = vmatprep.subr.mxu0 0.0
        %1661 = vmatpush1.msra.mxu0 %v1537
        %1662 = vmatprep.subr.mxu0 0.0
        %1663 = vmatpush1.msra.mxu0 %v1536
        %1664 = vmatprep.subr.mxu0 0.0
        %1665 = vmatpush1.msra.mxu0 %v1535
        %1666 = vmatprep.subr.mxu0 0.0
        %1667 = vmatpush1.msra.mxu0 %v1534
        %1668 = vmatprep.subr.mxu0 0.0
        %1669 = vmatpush1.msra.mxu0 %v1533
        %1670 = vmatprep.subr.mxu0 0.0
        %1671 = vmatpush1.msra.mxu0 %v1532
        %1672 = vmatprep.subr.mxu0 0.0
        %1673 = vmatpush2.msra.mxu0 0.0
        %1674 = vmatprep.subr.mxu0 0.0
        %1675 = vmatpush2.msra.mxu0 0.0
        %1676 = vmatprep.subr.mxu0 0.0
        %1677 = vmatpush2.msra.mxu0 0.0
        %1678 = vmatprep.subr.mxu0 0.0
        %1679 = vmatpush2.msra.mxu0 0.0
        %1680 = vmatprep.subr.mxu0 0.0
        %1681 = vmatpush2.msra.mxu0 0.0
        %1682 = vmatprep.subr.mxu0 0.0
        %1683 = vmatpush2.msra.mxu0 0.0
        %1684 = vmatprep.subr.mxu0 0.0
        %1685 = vmatpush2.msra.mxu0 0.0
        %1686 = vmatprep.subr.mxu0 0.0
        %1687 = vmatpush2.msra.mxu0 0.0
        %1688 = vmatprep.subr.mxu0 0.0
        %1689 = vmatpush2.msra.mxu0 0.0
        %1690 = vmatprep.subr.mxu0 0.0
        %1691 = vmatpush2.msra.mxu0 0.0
        %1692 = vmatprep.subr.mxu0 0.0
        %1693 = vmatpush2.msra.mxu0 0.0
        %1694 = vmatprep.subr.mxu0 0.0
        %1695 = vmatpush2.msra.mxu0 0.0
        %1696 = vmatprep.subr.mxu0 0.0
        %1697 = vmatpush2.msra.mxu0 0.0
        %1698 = vmatprep.subr.mxu0 0.0
        %1699 = vmatpush2.msra.mxu0 0.0
        %1700 = vmatprep.subr.mxu0 0.0
        %1701 = vmatpush2.msra.mxu0 0.0
        %1702 = vmatprep.subr.mxu0 0.0
        %1703 = vmatpush2.msra.mxu0 0.0
        %1704 = vmatprep.mubr.f32.mxu0 0.0
        %1705 = vmatmul.mubr.f32.gmra.mxu0 %v1638
        %v1706 = vpop.f32.mrf.mxu0
        %v1707 = vadd.f32 0.0, %v1706
        %v1708 = vpop.f32.mrf.mxu0
        %1709 = vdwg.mxu0
        %v1710 = vmax.f32 %v1707, 0.0
        %v1711 = vand.u32 2147483647, %v1707
        %v1712 = vsub.f32 0.0, %v1711
        %v1713 = vmul.f32 %v1712, 1.442695
        %v1714 = vpow.pop %v1713
        %v1715 = vadd.f32 %v1714, 1.0
        %v1716 = vlog2.pop %v1715
        %v1717 = vmul.f32 %v1716, 0.6931472
        %v1718 = vmul.f32 -0.5, %v1714
        %v1719 = vadd.f32 %v1718, 1.0
        %v1720 = vmul.f32 %v1719, %v1714
        %v1721 = vand.u32 2147483647, %v1714
        %vm1722 = vcmp.lt.f32.partialorder %v1721, 0.0004427343
        %v1723 = vsel %vm1722, %v1720, %v1717
        %v1724 = vadd.f32 %v1710, %v1723
        %v1725 = vadd.f32 %v1724, 0.05
        %vm1726 = vcmask 1043456
        %v1727 = vsel %vm1726, %v1725, 0.0
        %v1728 = vrot.slane %v1727, 4
        %v1729 = vadd.f32 %v1727, %v1728
        %v1730 = vrot.slane %v1729, 2
        %v1731 = vadd.f32 %v1729, %v1730
        %v1732 = vrot.slane %v1731, 1
        %v1733 = vadd.f32 %v1731, %v1732
        %v1734 = vrcp.pop %v1733
        %v1735 = vmul.f32 %v1725, %v1734
        %1736 = vst [vmem:[%s354] sm:$0xff] %v1628
        %1737 = vst [vmem:[%s354 + $0x8] sm:$0x1f] %v1633
        %1738 = vst [vmem:[%s361] sm:$0xf] %v1735
        %s1739 = sand.u32 %s230, 1
        %s1740 = scalar_lea.sflag [#allocation3], %s1739
        %s1741 = sand.u32 %s230, 1
        %s1742 = smul.addr %s1741, 16
        %s1743 = scalar_lea.vmem [#allocation2], %s1742
        %s1744 = sand.u32 %s256, 1
        %s1745 = scalar_lea.sflag [#allocation5], %s1744
        %s1746 = sand.u32 %s256, 1
        %s1747 = smul.addr %s1746, 4
        %s1748 = scalar_lea.vmem [#allocation4], %s1747
        // Predicated region
        $region57: #{tpu_custom_call.1} parent=55 // pred_check
          %p1749 = pneg %p240
        $region58: #{tpu_custom_call.1} parent=55 // pred_check_branch
          %1751 = sbr.rel (%p1749) target = $region60
        $region59: #{tpu_custom_call.1} parent=55 // pred_region
          %s1753 = ssub.s32 256, 256
          %1754 = vsyncadd %s1740, %s1753
          %s1755 = smul.addr %s28, 128
          %s1756 = scalar_lea.hbm %s9, %s1755
          %s1757 = sshll.u32 %s1743, 4
          %s1758 = int_to_ptr.vmem [resolvable:$true] %s1757
          %1763 = dma.vmem_to_hbm [thread:$0]  %s1758, 256, %s1756, %s1740, 128, 256, 8
        $region60: #{tpu_custom_call.1} parent=55 // pred_fallthru
          _
        // Predicated region
        $region61: #{tpu_custom_call.1} parent=55 // pred_check
          %p1764 = pneg %p266
        $region62: #{tpu_custom_call.1} parent=55 // pred_check_branch
          %1766 = sbr.rel (%p1764) target = $region64
        $region63: #{tpu_custom_call.1} parent=55 // pred_region
          %s1768 = ssub.s32 64, 64
          %1769 = vsyncadd %s1745, %s1768
          %s1770 = smul.addr %s28, 64
          %s1771 = scalar_lea.hbm %s10, %s1770
          %s1773 = sshll.u32 %s1748, 4
          %s1774 = int_to_ptr.vmem [resolvable:$true] %s1773
          %1776 = dma.vmem_to_hbm [thread:$0]  %s1774, 64, %s1771, %s1745
        $region64: #{tpu_custom_call.1} parent=55 // pred_fallthru
          _
      $region56: #{tpu_custom_call.1} parent=5 // pred_fallthru
        _
      %p1777 = scmp.le.s32.totalorder 2, %s23
      // Predicated region
      $region65: #{tpu_custom_call.1} parent=5 // pred_check
        %p1778 = pneg %p1777
      $region66: #{tpu_custom_call.1} parent=5 // pred_check_branch
        %1780 = sbr.rel (%p1778) target = $region68
      $region67: #{tpu_custom_call.1} parent=5 // pred_region
        %s1781 = ssub.s32 %s23, 2
        // Predicated region
        $region69: #{tpu_custom_call.1} parent=67 // pred_check
          %p1782 = pneg %p246
        $region70: #{tpu_custom_call.1} parent=67 // pred_check_branch
          %1784 = sbr.rel (%p1782) target = $region72
        $region71: #{tpu_custom_call.1} parent=67 // pred_region
          %s1785 = sand.u32 %s231, 1
          %s1786 = scalar_lea.sflag [#allocation3], %s1785
          %s1787 = sand.u32 %s231, 1
          %s1788 = smul.addr %s1787, 16
          %s1789 = scalar_lea.vmem [#allocation2], %s1788
          %1790 = dma.done %s1786, 256
        $region72: #{tpu_custom_call.1} parent=67 // pred_fallthru
          _
        // Predicated region
        $region73: #{tpu_custom_call.1} parent=67 // pred_check
          %p1791 = pneg %p272
        $region74: #{tpu_custom_call.1} parent=67 // pred_check_branch
          %1793 = sbr.rel (%p1791) target = $region76
        $region75: #{tpu_custom_call.1} parent=67 // pred_region
          %s1794 = sand.u32 %s257, 1
          %s1795 = scalar_lea.sflag [#allocation5], %s1794
          %s1796 = sand.u32 %s257, 1
          %s1797 = smul.addr %s1796, 4
          %s1798 = scalar_lea.vmem [#allocation4], %s1797
          %1799 = dma.done %s1795, 64
        $region76: #{tpu_custom_call.1} parent=67 // pred_fallthru
          _
      $region68: #{tpu_custom_call.1} parent=5 // pred_fallthru
        _
    $region6: #{tpu_custom_call.1} parent=1 // loop_footer
      %s27 = sadd.s32 1, %s23
    $region7: #{tpu_custom_call.1} parent=1 // loop_footer_branch
      %22 = sbr.rel target = $region3
    $region8: #{tpu_custom_call.1} parent=1 // loop_exit
      _
    %1800 = vsyncpa [#allocation3], 1
    %s1801 = scalar_lea.sflag [#allocation3], 1
    %1802 = vsyncpa %s1801, 1
    %1803 = vsyncpa [#allocation5], 1
    %s1804 = scalar_lea.sflag [#allocation5], 1
    %1805 = vsyncpa %s1804, 1

</llo_original>
